<compile_context>
chip_gen: v6e
topology: v6e:2x2x1
jax: 0.10.0
libtpu: 0.0.40
codegen_flags: <defaults>
</compile_context>

<pallas_src>
import math

import jax
import jax.numpy as jnp
from jax.experimental import pallas as pl
from jax.experimental.pallas import tpu as pltpu

IN_DIM = 3 * 28 * 28     # 2352
H1 = 256
H2 = 128
OUT_DIM = 10
OUT_PAD = 128            # lane-dense fc3 output width (wrapper slices [:, :10])
ACT_DTYPE = jnp.bfloat16  # dtype of the returned fc1/fc2 activation cache
                          # (switch to jnp.float32 if exact f32 cache is needed)


def _round_up(n, m):
    return ((n + m - 1) // m) * m


def _default_tm():
    """256 fills the v6e/v7x 2x256^2 MXU; v5e's MXU is 4x128^2 -> keep 128."""
    try:
        kind = jax.devices()[0].device_kind.lower()
        if "v5 lite" in kind or "v5e" in kind:
            return 128
    except Exception:
        pass
    return 256


# --------------------------------------------------------------------------- #
# Kernels
# --------------------------------------------------------------------------- #
def _layers(x_ref, w1_ref, b1_ref, w2_ref, b2_ref, w3_ref, b3_ref):
    # In-kernel bf16 cast of x (avoids a padded bf16 HBM copy in the wrapper).
    x = x_ref[...].astype(jnp.bfloat16)
    # fc1 + relu (bf16 MXU inputs, f32 accumulate)
    h1 = jnp.dot(x, w1_ref[...], preferred_element_type=jnp.float32)
    h1 = jnp.maximum(h1 + b1_ref[...], 0.0)
    # fc2 + relu
    h2 = jnp.dot(h1.astype(jnp.bfloat16), w2_ref[...],
                 preferred_element_type=jnp.float32)
    h2 = jnp.maximum(h2 + b2_ref[...], 0.0)
    # fc3 (no activation); lane-padded to 128 cols, pad cols of w3/b3 are zero.
    h3 = jnp.dot(h2.astype(jnp.bfloat16), w3_ref[...],
                 preferred_element_type=jnp.float32)
    h3 = h3 + b3_ref[...]
    return h1, h2, h3


def mlp_kernel_cached(x_ref, w1_ref, b1_ref, w2_ref, b2_ref, w3_ref, b3_ref,
                      fc1_ref, fc2_ref, fc3_ref):
    h1, h2, h3 = _layers(x_ref, w1_ref, b1_ref, w2_ref, b2_ref, w3_ref, b3_ref)
    fc1_ref[...] = h1.astype(fc1_ref.dtype)   # activation_cache['fc1']
    fc2_ref[...] = h2.astype(fc2_ref.dtype)   # activation_cache['fc2']
    fc3_ref[...] = h3                         # activation_cache['fc3'] / output


def mlp_kernel_logits(x_ref, w1_ref, b1_ref, w2_ref, b2_ref, w3_ref, b3_ref,
                      fc3_ref):
    _, _, h3 = _layers(x_ref, w1_ref, b1_ref, w2_ref, b2_ref, w3_ref, b3_ref)
    fc3_ref[...] = h3


# --------------------------------------------------------------------------- #
# Parameter prep (one-time; do NOT call per forward)
# --------------------------------------------------------------------------- #
def prepare_params(params):
    """Cast/pad weights once. Returns arrays the kernel consumes directly:
    bf16 weights (w3 lane-padded to 128 cols), f32 biases (b3 padded)."""
    w1, b1, w2, b2, w3, b3 = params
    w1_bf = w1.astype(jnp.bfloat16)
    w2_bf = w2.astype(jnp.bfloat16)
    w3_bf = jnp.zeros((H2, OUT_PAD), jnp.bfloat16).at[:, :OUT_DIM].set(
        w3.astype(jnp.bfloat16))
    b1_f = b1.reshape(1, H1).astype(jnp.float32)
    b2_f = b2.reshape(1, H2).astype(jnp.float32)
    b3_f = jnp.zeros((1, OUT_PAD), jnp.float32).at[:, :OUT_DIM].set(
        b3.reshape(1, OUT_DIM))
    return (w1_bf, b1_f, w2_bf, b2_f, w3_bf, b3_f)


# --------------------------------------------------------------------------- #
# Forward wrapper
# --------------------------------------------------------------------------- #
def colored_mnist_forward(x, prepared_params, cache_activations=True):
    """x: (B, 3, 28, 28) float32 (any layout that flattens to 2352 per row).
    prepared_params: output of prepare_params().

    Returns (fc3_out[B,10] f32, fc1_out[B,256], fc2_out[B,128]); fc1/fc2 are
    None when cache_activations=False (skips their HBM writeback).
    """
    w1_bf, b1_f, w2_bf, b2_f, w3_bf, b3_f = prepared_params

    x_flat = x.reshape(-1, IN_DIM)              # f32, no pad, no copy of dtype
    B = x_flat.shape[0]

    # Batch tiling: ragged last tile (Pallas masks edge reads/writes).
    tm = min(_default_tm(), _round_up(max(B, 1), 8))
    num_tiles = -(-B // tm)
    if num_tiles == 1 and tm > 128:
        # Split a single large tile in two so the "parallel" grid axis can be
        # sharded across both v7x TensorCores.
        tm = _round_up(-(-B // 2), 8)
        num_tiles = -(-B // tm)
    grid = (num_tiles,)

    # x steps along the grid; weights/biases keep a constant block index ->
    # DMA'd once, VMEM-resident for the whole grid.
    if num_tiles >= 3:
        x_spec = pl.BlockSpec((tm, IN_DIM), lambda i: (i, 0),
                              pipeline_mode=pl.Buffered(3))
    else:
        x_spec = pl.BlockSpec((tm, IN_DIM), lambda i: (i, 0))
    tile = lambda n: pl.BlockSpec((tm, n), lambda i: (i, 0))
    resident = lambda shape: pl.BlockSpec(shape, lambda i: (0, 0))

    in_specs = [
        x_spec,                                            # x (f32, un-padded)
        resident((IN_DIM, H1)), resident((1, H1)),         # w1, b1
        resident((H1, H2)),     resident((1, H2)),         # w2, b2
        resident((H2, OUT_PAD)), resident((1, OUT_PAD)),   # w3, b3 (padded)
    ]

    # Honest traffic/flop estimate for XLA's scheduler (post-rework numbers).
    flops = 2 * B * (IN_DIM * H1 + H1 * H2 + H2 * OUT_PAD)
    bytes_in = (B * IN_DIM * 4
                + (w1_bf.size + w2_bf.size + w3_bf.size) * 2
                + (b1_f.size + b2_f.size + b3_f.size) * 4)

    if cache_activations:
        out_shape = (
            jax.ShapeDtypeStruct((B, H1), ACT_DTYPE),
            jax.ShapeDtypeStruct((B, H2), ACT_DTYPE),
            jax.ShapeDtypeStruct((B, OUT_PAD), jnp.float32),
        )
        out_specs = [tile(H1), tile(H2), tile(OUT_PAD)]
        bytes_out = B * ((H1 + H2) * ACT_DTYPE.dtype.itemsize + OUT_PAD * 4)
        kernel = mlp_kernel_cached
    else:
        out_shape = jax.ShapeDtypeStruct((B, OUT_PAD), jnp.float32)
        out_specs = tile(OUT_PAD)
        bytes_out = B * OUT_PAD * 4
        kernel = mlp_kernel_logits

    result = pl.pallas_call(
        kernel,
        out_shape=out_shape,
        grid_spec=pltpu.PrefetchScalarGridSpec(
            num_scalar_prefetch=0,
            grid=grid,
            in_specs=in_specs,
            out_specs=out_specs,
        ),
        compiler_params=pltpu.CompilerParams(
            dimension_semantics=("parallel",),
            vmem_limit_bytes=32 << 20,
        ),
        cost_estimate=pl.CostEstimate(
            flops=flops, transcendentals=0,
            bytes_accessed=bytes_in + bytes_out),
    )(x_flat, w1_bf, b1_f, w2_bf, b2_f, w3_bf, b3_f)

    if cache_activations:
        fc1_o, fc2_o, fc3_o = result
        return fc3_o[:, :OUT_DIM], fc1_o, fc2_o
    else:
        return result[:, :OUT_DIM], None, None


# TODO(synk): the PyTorch module appends activations to a stateful Python list
# (activation_cache) inside forward(); a Pallas kernel is functional, so the
# activations are returned to the caller instead of mutated into module state.


# --------------------------------------------------------------------------- #
# Init / reference / self-test
# --------------------------------------------------------------------------- #
def init_params(key):
    """Deterministic init mimicking torch.nn.Linear defaults:
    U(-1/sqrt(fan_in), 1/sqrt(fan_in)) for weight and bias."""
    ks = jax.random.split(key, 6)

    def linear(kw, kb, fan_in, fan_out):
        bound = 1.0 / math.sqrt(fan_in)
        w = jax.random.uniform(kw, (fan_in, fan_out), jnp.float32, -bound, bound)
        b = jax.random.uniform(kb, (1, fan_out), jnp.float32, -bound, bound)
        return w, b

    w1, b1 = linear(ks[0], ks[1], IN_DIM, H1)
    w2, b2 = linear(ks[2], ks[3], H1, H2)
    w3, b3 = linear(ks[4], ks[5], H2, OUT_DIM)
    return (w1, b1, w2, b2, w3, b3)


def reference_forward(x, params):
    """Pure-JAX f32 reference for correctness check."""
    w1, b1, w2, b2, w3, b3 = params
    xf = x.reshape(x.shape[0], IN_DIM)
    h1 = jnp.maximum(xf @ w1 + b1, 0.0)
    h2 = jnp.maximum(h1 @ w2 + b2, 0.0)
    return h2 @ w3 + b3


if __name__ == "__main__":
    key = jax.random.PRNGKey(0)
    k_param, k_x = jax.random.split(key)

    params = init_params(k_param)
    prepared = prepare_params(params)           # one-time cast/pad (cached)
    x = jax.random.normal(k_x, (2, 3, 28, 28), jnp.float32)  # batch=2, NCHW

    fwd = jax.jit(colored_mnist_forward, static_argnames=("cache_activations",))

    fc3_out, fc1_out, fc2_out = jax.block_until_ready(
        fwd(x, prepared, cache_activations=True))
    logits_only, _, _ = jax.block_until_ready(
        fwd(x, prepared, cache_activations=False))

    ref = reference_forward(x, params)
    assert fc3_out.shape == (2, OUT_DIM)
    assert fc1_out.shape == (2, H1) and fc2_out.shape == (2, H2)
    # bf16-quantized weights / in-kernel bf16 x (f32 accumulation) -> loosened tol.
    assert jnp.allclose(fc3_out, ref, atol=5e-2, rtol=5e-2), "mismatch vs reference"
    assert jnp.allclose(logits_only, fc3_out, atol=1e-6, rtol=1e-6), \
        "cache / no-cache paths disagree"

    print("KERNEL_OK")
</pallas_src>

<mosaic_0001>
module attributes {stable_mosaic.version = 11 : i64} {
  func.func @mlp_kernel_cached(%arg0: i32, %arg1: memref<8x2352xf32, #tpu.memory_space<vmem>>, %arg2: memref<2352x256xbf16, #tpu.memory_space<vmem>>, %arg3: memref<1x256xf32, #tpu.memory_space<vmem>>, %arg4: memref<256x128xbf16, #tpu.memory_space<vmem>>, %arg5: memref<1x128xf32, #tpu.memory_space<vmem>>, %arg6: memref<128x128xbf16, #tpu.memory_space<vmem>>, %arg7: memref<1x128xf32, #tpu.memory_space<vmem>>, %arg8: memref<8x256xbf16, #tpu.memory_space<vmem>>, %arg9: memref<8x128xbf16, #tpu.memory_space<vmem>>, %arg10: memref<8x128xf32, #tpu.memory_space<vmem>>) attributes {dimension_semantics = [#tpu.dimension_semantics<parallel>], iteration_bounds = array<i64: 1>, scalar_prefetch = 0 : i64, scratch_operands = 0 : i64, tpu.core_type = #tpu.core_type<tc>, window_params = [{transform_indices = @transform_0, window_bounds = array<i64: 8, 2352>}, {pipeline_mode = #tpu.pipeline_mode<synchronous>, transform_indices = @transform_1, window_bounds = array<i64: 2352, 256>}, {pipeline_mode = #tpu.pipeline_mode<synchronous>, transform_indices = @transform_2, window_bounds = array<i64: 1, 256>}, {pipeline_mode = #tpu.pipeline_mode<synchronous>, transform_indices = @transform_3, window_bounds = array<i64: 256, 128>}, {pipeline_mode = #tpu.pipeline_mode<synchronous>, transform_indices = @transform_4, window_bounds = array<i64: 1, 128>}, {pipeline_mode = #tpu.pipeline_mode<synchronous>, transform_indices = @transform_5, window_bounds = array<i64: 128, 128>}, {pipeline_mode = #tpu.pipeline_mode<synchronous>, transform_indices = @transform_6, window_bounds = array<i64: 1, 128>}, {transform_indices = @transform_7, window_bounds = array<i64: 8, 256>}, {transform_indices = @transform_8, window_bounds = array<i64: 8, 128>}, {transform_indices = @transform_9, window_bounds = array<i64: 8, 128>}]} {
    %c0 = arith.constant 0 : index
    %c0_0 = arith.constant 0 : index
    %0 = vector.load %arg1[%c0, %c0_0] : memref<8x2352xf32, #tpu.memory_space<vmem>>, vector<8x2352xf32>
    %1 = arith.truncf %0 : vector<8x2352xf32> to vector<8x2352xbf16>
    %c0_1 = arith.constant 0 : index
    %c0_2 = arith.constant 0 : index
    %2 = vector.load %arg2[%c0_1, %c0_2] : memref<2352x256xbf16, #tpu.memory_space<vmem>>, vector<2352x256xbf16>
    %cst = arith.constant dense<0.000000e+00> : vector<8x256xf32>
    %3 = tpu.matmul %1, %2, %cst {dimension_numbers = #tpu.dot_dimension_numbers<[1], [0], [0], [1], [0, 0, 1, 1], [], []>} : vector<8x2352xbf16>, vector<2352x256xbf16>, vector<8x256xf32> -> vector<8x256xf32>
    %c0_3 = arith.constant 0 : index
    %c0_4 = arith.constant 0 : index
    %4 = vector.load %arg3[%c0_3, %c0_4] : memref<1x256xf32, #tpu.memory_space<vmem>>, vector<1x256xf32>
    %5 = vector.broadcast %4 : vector<1x256xf32> to vector<8x256xf32>
    %6 = arith.addf %3, %5 : vector<8x256xf32>
    %cst_5 = arith.constant 0.000000e+00 : f32
    %7 = vector.broadcast %cst_5 : f32 to vector<8x256xf32>
    %8 = arith.maximumf %6, %7 : vector<8x256xf32>
    %9 = arith.truncf %8 : vector<8x256xf32> to vector<8x256xbf16>
    %c0_6 = arith.constant 0 : index
    %c0_7 = arith.constant 0 : index
    %10 = vector.load %arg4[%c0_6, %c0_7] : memref<256x128xbf16, #tpu.memory_space<vmem>>, vector<256x128xbf16>
    %cst_8 = arith.constant dense<0.000000e+00> : vector<8x128xf32>
    %11 = tpu.matmul %9, %10, %cst_8 {dimension_numbers = #tpu.dot_dimension_numbers<[1], [0], [0], [1], [0, 0, 1, 1], [], []>} : vector<8x256xbf16>, vector<256x128xbf16>, vector<8x128xf32> -> vector<8x128xf32>
    %c0_9 = arith.constant 0 : index
    %c0_10 = arith.constant 0 : index
    %12 = vector.load %arg5[%c0_9, %c0_10] : memref<1x128xf32, #tpu.memory_space<vmem>>, vector<1x128xf32>
    %13 = vector.broadcast %12 : vector<1x128xf32> to vector<8x128xf32>
    %14 = arith.addf %11, %13 : vector<8x128xf32>
    %cst_11 = arith.constant 0.000000e+00 : f32
    %15 = vector.broadcast %cst_11 : f32 to vector<8x128xf32>
    %16 = arith.maximumf %14, %15 : vector<8x128xf32>
    %17 = arith.truncf %16 : vector<8x128xf32> to vector<8x128xbf16>
    %c0_12 = arith.constant 0 : index
    %c0_13 = arith.constant 0 : index
    %18 = vector.load %arg6[%c0_12, %c0_13] : memref<128x128xbf16, #tpu.memory_space<vmem>>, vector<128x128xbf16>
    %cst_14 = arith.constant dense<0.000000e+00> : vector<8x128xf32>
    %19 = tpu.matmul %17, %18, %cst_14 {dimension_numbers = #tpu.dot_dimension_numbers<[1], [0], [0], [1], [0, 0, 1, 1], [], []>} : vector<8x128xbf16>, vector<128x128xbf16>, vector<8x128xf32> -> vector<8x128xf32>
    %c0_15 = arith.constant 0 : index
    %c0_16 = arith.constant 0 : index
    %20 = vector.load %arg7[%c0_15, %c0_16] : memref<1x128xf32, #tpu.memory_space<vmem>>, vector<1x128xf32>
    %21 = vector.broadcast %20 : vector<1x128xf32> to vector<8x128xf32>
    %22 = arith.addf %19, %21 : vector<8x128xf32>
    %23 = arith.truncf %8 : vector<8x256xf32> to vector<8x256xbf16>
    %c0_17 = arith.constant 0 : index
    %c0_18 = arith.constant 0 : index
    %24 = vector.load %arg8[%c0_17, %c0_18] : memref<8x256xbf16, #tpu.memory_space<vmem>>, vector<8x256xbf16>
    tpu.vector_store %arg8[%c0_17, %c0_18], %23 {strides = array<i32>} : memref<8x256xbf16, #tpu.memory_space<vmem>>, vector<8x256xbf16>,
    %25 = arith.truncf %16 : vector<8x128xf32> to vector<8x128xbf16>
    %c0_19 = arith.constant 0 : index
    %c0_20 = arith.constant 0 : index
    %26 = vector.load %arg9[%c0_19, %c0_20] : memref<8x128xbf16, #tpu.memory_space<vmem>>, vector<8x128xbf16>
    tpu.vector_store %arg9[%c0_19, %c0_20], %25 {strides = array<i32>} : memref<8x128xbf16, #tpu.memory_space<vmem>>, vector<8x128xbf16>,
    %c0_21 = arith.constant 0 : index
    %c0_22 = arith.constant 0 : index
    %27 = vector.load %arg10[%c0_21, %c0_22] : memref<8x128xf32, #tpu.memory_space<vmem>>, vector<8x128xf32>
    tpu.vector_store %arg10[%c0_21, %c0_22], %22 {strides = array<i32>} : memref<8x128xf32, #tpu.memory_space<vmem>>, vector<8x128xf32>,
    return
  }
  func.func @transform_0(%arg0: i32) -> (i32, i32) {
    %c0_i32 = arith.constant 0 : i32
    %c0_i32_0 = arith.constant 0 : i32
    return %arg0, %c0_i32 : i32, i32
  }
  func.func @transform_1(%arg0: i32) -> (i32, i32) {
    %c0_i32 = arith.constant 0 : i32
    %c0_i32_0 = arith.constant 0 : i32
    %c0_i32_1 = arith.constant 0 : i32
    return %c0_i32, %c0_i32_0 : i32, i32
  }
  func.func @transform_2(%arg0: i32) -> (i32, i32) {
    %c0_i32 = arith.constant 0 : i32
    %c0_i32_0 = arith.constant 0 : i32
    %c0_i32_1 = arith.constant 0 : i32
    return %c0_i32, %c0_i32_0 : i32, i32
  }
  func.func @transform_3(%arg0: i32) -> (i32, i32) {
    %c0_i32 = arith.constant 0 : i32
    %c0_i32_0 = arith.constant 0 : i32
    %c0_i32_1 = arith.constant 0 : i32
    return %c0_i32, %c0_i32_0 : i32, i32
  }
  func.func @transform_4(%arg0: i32) -> (i32, i32) {
    %c0_i32 = arith.constant 0 : i32
    %c0_i32_0 = arith.constant 0 : i32
    %c0_i32_1 = arith.constant 0 : i32
    return %c0_i32, %c0_i32_0 : i32, i32
  }
  func.func @transform_5(%arg0: i32) -> (i32, i32) {
    %c0_i32 = arith.constant 0 : i32
    %c0_i32_0 = arith.constant 0 : i32
    %c0_i32_1 = arith.constant 0 : i32
    return %c0_i32, %c0_i32_0 : i32, i32
  }
  func.func @transform_6(%arg0: i32) -> (i32, i32) {
    %c0_i32 = arith.constant 0 : i32
    %c0_i32_0 = arith.constant 0 : i32
    %c0_i32_1 = arith.constant 0 : i32
    return %c0_i32, %c0_i32_0 : i32, i32
  }
  func.func @transform_7(%arg0: i32) -> (i32, i32) {
    %c0_i32 = arith.constant 0 : i32
    %c0_i32_0 = arith.constant 0 : i32
    return %arg0, %c0_i32 : i32, i32
  }
  func.func @transform_8(%arg0: i32) -> (i32, i32) {
    %c0_i32 = arith.constant 0 : i32
    %c0_i32_0 = arith.constant 0 : i32
    return %arg0, %c0_i32 : i32, i32
  }
  func.func @transform_9(%arg0: i32) -> (i32, i32) {
    %c0_i32 = arith.constant 0 : i32
    %c0_i32_0 = arith.constant 0 : i32
    return %arg0, %c0_i32 : i32, i32
  }
}

</mosaic_0001>

<llo_original>
// kernel: colored_mnist_forward.1
$region0: #{colored_mnist_forward.1}
  #allocation0 [shape = 'u32[]', space=smem, size = 0x4, offset = 0x4, fixed_abs, tag = 'smem constant byte address 0x4 - core index']
  #allocation1 [shape = 'u32[144,128]{1,0:T(1,128)}', space=vmem, size = 0x12000, scoped, tag = 'internal scratch']
  %s0 = inlined_call_operand.vmem [shape: f32[2,2352], index: 0, kind: input, shape index: {}]
  %s1 = inlined_call_operand.hbm [shape: bf16[2352,256], index: 1, kind: input, shape index: {}]
  %s2 = inlined_call_operand.hbm [shape: f32[1,256], index: 2, kind: input, shape index: {}]
  %s3 = inlined_call_operand.hbm [shape: bf16[256,128], index: 3, kind: input, shape index: {}]
  %s4 = inlined_call_operand.hbm [shape: f32[1,128], index: 4, kind: input, shape index: {}]
  %s5 = inlined_call_operand.hbm [shape: bf16[128,128], index: 5, kind: input, shape index: {}]
  %s6 = inlined_call_operand.hbm [shape: f32[1,128], index: 6, kind: input, shape index: {}]
  %s7 = inlined_call_operand.hbm [shape: bf16[2,256], index: 7, kind: output, shape index: {0}]
  %s8 = inlined_call_operand.hbm [shape: bf16[2,128], index: 8, kind: output, shape index: {1}]
  %s9 = inlined_call_operand.hbm [shape: f32[2,128], index: 9, kind: output, shape index: {2}]
  %10 = xla_tuple %s7, %s8, %s9
  %s11 = sld [smem:[#allocation0]]
  $region78: #{colored_mnist_forward.1} parent=0
    _
  %s13 = ssub.s32 1, %s11
  %s14 = scalar_select 0, %s13, %s11
  $region1: #{colored_mnist_forward.1} parent=0
    #allocation2 [shape = 'u8[1204224]{0}', space=vmem, size = 0x126000, scoped, tag = 'input window, operand 1, single buffered']
    #allocation3 [shape = 's32[1]{0}', space=sflag, size = 0x4, scoped, tag = 'scoped memory for colored_mnist_forward.1']
    #allocation4 [shape = 's32[1]{0}', space=sflag, size = 0x4, scoped, tag = 'scoped memory for colored_mnist_forward.1']
    #allocation5 [shape = 'u8[1024]{0}', space=vmem, size = 0x400, scoped, tag = 'input window, operand 2, single buffered']
    #allocation6 [shape = 's32[1]{0}', space=sflag, size = 0x4, scoped, tag = 'scoped memory for colored_mnist_forward.1']
    #allocation7 [shape = 'u8[65536]{0}', space=vmem, size = 0x10000, scoped, tag = 'input window, operand 3, single buffered']
    #allocation8 [shape = 'u8[512]{0}', space=vmem, size = 0x400, scoped, tag = 'input window, operand 4, single buffered']
    #allocation9 [shape = 's32[1]{0}', space=sflag, size = 0x4, scoped, tag = 'scoped memory for colored_mnist_forward.1']
    #allocation10 [shape = 'u8[32768]{0}', space=vmem, size = 0x8000, scoped, tag = 'input window, operand 5, single buffered']
    #allocation11 [shape = 'u8[512]{0}', space=vmem, size = 0x400, scoped, tag = 'input window, operand 6, single buffered']
    #allocation12 [shape = 's32[1]{0}', space=sflag, size = 0x4, scoped, tag = 'scoped memory for colored_mnist_forward.1']
    #allocation13 [shape = 'u8[4096]{0}', space=vmem, size = 0x1000, scoped, tag = 'output window, operand 0, single buffered']
    #allocation14 [shape = 'u8[2048]{0}', space=vmem, size = 0x800, scoped, tag = 'output window, operand 1, single buffered']
    #allocation15 [shape = 's32[1]{0}', space=sflag, size = 0x4, scoped, tag = 'scoped memory for colored_mnist_forward.1']
    #allocation16 [shape = 'u8[4096]{0}', space=vmem, size = 0x1000, scoped, tag = 'output window, operand 2, single buffered']
    %15 = vsyncpa [#allocation3], 0
    %16 = vsyncpa [#allocation6], 0
    %17 = vsyncpa [#allocation9], 0
    %18 = vsyncpa [#allocation12], 0
    %19 = vsyncpa [#allocation4], 0
    %20 = vsyncpa [#allocation15], 0
    // Predicated region
    $region2: #{colored_mnist_forward.1} parent=1 // pred_check
      _
    $region3: #{colored_mnist_forward.1} parent=1 // pred_check_branch
      %22 = sbr.rel (0) target = $region5
    $region4: #{colored_mnist_forward.1} parent=1 // pred_region
      _
    $region5: #{colored_mnist_forward.1} parent=1 // pred_fallthru
      _
    // Predicated region
    $region6: #{colored_mnist_forward.1} parent=1 // pred_check
      _
    $region7: #{colored_mnist_forward.1} parent=1 // pred_check_branch
      %24 = sbr.rel (0) target = $region9
    $region8: #{colored_mnist_forward.1} parent=1 // pred_region
      %s26 = ssub.s32 37632, 37632
      %27 = vsyncadd [#allocation3], %s26
      %s28 = sshll.u32 [#allocation2], 4
      %s29 = int_to_ptr.vmem [resolvable:$true] %s28
      %34 = dma.hbm_to_vmem [thread:$0]  %s1, 37632, %s29, [#allocation3], 128, 128, 8
    $region9: #{colored_mnist_forward.1} parent=1 // pred_fallthru
      _
    // Predicated region
    $region10: #{colored_mnist_forward.1} parent=1 // pred_check
      _
    $region11: #{colored_mnist_forward.1} parent=1 // pred_check_branch
      %36 = sbr.rel (0) target = $region13
    $region12: #{colored_mnist_forward.1} parent=1 // pred_region
      %s38 = ssub.s32 32, 32
      %39 = vsyncadd [#allocation6], %s38
      %s41 = sshll.u32 [#allocation5], 4
      %s42 = int_to_ptr.vmem [resolvable:$true] %s41
      %44 = dma.hbm_to_vmem [thread:$0]  %s2, 32, %s42, [#allocation6]
    $region13: #{colored_mnist_forward.1} parent=1 // pred_fallthru
      _
    // Predicated region
    $region14: #{colored_mnist_forward.1} parent=1 // pred_check
      _
    $region15: #{colored_mnist_forward.1} parent=1 // pred_check_branch
      %46 = sbr.rel (0) target = $region17
    $region16: #{colored_mnist_forward.1} parent=1 // pred_region
      %s48 = ssub.s32 2048, 2048
      %49 = vsyncadd [#allocation6], %s48
      %s50 = sshll.u32 [#allocation7], 4
      %s51 = int_to_ptr.vmem [resolvable:$true] %s50
      %56 = dma.hbm_to_vmem [thread:$0]  %s3, 2048, %s51, [#allocation6], 64, 64, 4
    $region17: #{colored_mnist_forward.1} parent=1 // pred_fallthru
      _
    // Predicated region
    $region18: #{colored_mnist_forward.1} parent=1 // pred_check
      _
    $region19: #{colored_mnist_forward.1} parent=1 // pred_check_branch
      %58 = sbr.rel (0) target = $region21
    $region20: #{colored_mnist_forward.1} parent=1 // pred_region
      %s60 = ssub.s32 16, 16
      %61 = vsyncadd [#allocation9], %s60
      %s63 = sshll.u32 [#allocation8], 4
      %s64 = int_to_ptr.vmem [resolvable:$true] %s63
      %66 = dma.hbm_to_vmem [thread:$0]  %s4, 16, %s64, [#allocation9]
    $region21: #{colored_mnist_forward.1} parent=1 // pred_fallthru
      _
    // Predicated region
    $region22: #{colored_mnist_forward.1} parent=1 // pred_check
      _
    $region23: #{colored_mnist_forward.1} parent=1 // pred_check_branch
      %68 = sbr.rel (0) target = $region25
    $region24: #{colored_mnist_forward.1} parent=1 // pred_region
      %s70 = ssub.s32 1024, 1024
      %71 = vsyncadd [#allocation9], %s70
      %s72 = sshll.u32 [#allocation10], 4
      %s73 = int_to_ptr.vmem [resolvable:$true] %s72
      %78 = dma.hbm_to_vmem [thread:$0]  %s5, 1024, %s73, [#allocation9], 64, 64, 4
    $region25: #{colored_mnist_forward.1} parent=1 // pred_fallthru
      _
    // Predicated region
    $region26: #{colored_mnist_forward.1} parent=1 // pred_check
      _
    $region27: #{colored_mnist_forward.1} parent=1 // pred_check_branch
      %80 = sbr.rel (0) target = $region29
    $region28: #{colored_mnist_forward.1} parent=1 // pred_region
      %s82 = ssub.s32 16, 16
      %83 = vsyncadd [#allocation12], %s82
      %s85 = sshll.u32 [#allocation11], 4
      %s86 = int_to_ptr.vmem [resolvable:$true] %s85
      %88 = dma.hbm_to_vmem [thread:$0]  %s6, 16, %s86, [#allocation12]
    $region29: #{colored_mnist_forward.1} parent=1 // pred_fallthru
      _
    // Predicated region
    $region30: #{colored_mnist_forward.1} parent=1 // pred_check
      _
    $region31: #{colored_mnist_forward.1} parent=1 // pred_check_branch
      %90 = sbr.rel (0) target = $region33
    $region32: #{colored_mnist_forward.1} parent=1 // pred_region
      %91 = dma.done [#allocation3], 37632
    $region33: #{colored_mnist_forward.1} parent=1 // pred_fallthru
      _
    // Predicated region
    $region34: #{colored_mnist_forward.1} parent=1 // pred_check
      _
    $region35: #{colored_mnist_forward.1} parent=1 // pred_check_branch
      %93 = sbr.rel (0) target = $region37
    $region36: #{colored_mnist_forward.1} parent=1 // pred_region
      %94 = dma.done [#allocation6], 32
    $region37: #{colored_mnist_forward.1} parent=1 // pred_fallthru
      _
    // Predicated region
    $region38: #{colored_mnist_forward.1} parent=1 // pred_check
      _
    $region39: #{colored_mnist_forward.1} parent=1 // pred_check_branch
      %96 = sbr.rel (0) target = $region41
    $region40: #{colored_mnist_forward.1} parent=1 // pred_region
      %97 = dma.done [#allocation6], 2048
    $region41: #{colored_mnist_forward.1} parent=1 // pred_fallthru
      _
    // Predicated region
    $region42: #{colored_mnist_forward.1} parent=1 // pred_check
      _
    $region43: #{colored_mnist_forward.1} parent=1 // pred_check_branch
      %99 = sbr.rel (0) target = $region45
    $region44: #{colored_mnist_forward.1} parent=1 // pred_region
      %100 = dma.done [#allocation9], 16
    $region45: #{colored_mnist_forward.1} parent=1 // pred_fallthru
      _
    // Predicated region
    $region46: #{colored_mnist_forward.1} parent=1 // pred_check
      _
    $region47: #{colored_mnist_forward.1} parent=1 // pred_check_branch
      %102 = sbr.rel (0) target = $region49
    $region48: #{colored_mnist_forward.1} parent=1 // pred_region
      %103 = dma.done [#allocation9], 1024
    $region49: #{colored_mnist_forward.1} parent=1 // pred_fallthru
      _
    // Predicated region
    $region50: #{colored_mnist_forward.1} parent=1 // pred_check
      _
    $region51: #{colored_mnist_forward.1} parent=1 // pred_check_branch
      %105 = sbr.rel (0) target = $region53
    $region52: #{colored_mnist_forward.1} parent=1 // pred_region
      %106 = dma.done [#allocation12], 16
    $region53: #{colored_mnist_forward.1} parent=1 // pred_fallthru
      _
    %v108 = vld [vmem:[%s0] sm:$0xff]
    %v109 = vld [vmem:[%s0 + $0x8] sm:$0xff]
    %v110 = vld [vmem:[%s0 + $0x10] sm:$0xff]
    %v111 = vld [vmem:[%s0 + $0x18] sm:$0xff]
    %v112 = vld [vmem:[%s0 + $0x20] sm:$0x3f]
    %v113 = vld [vmem:[%s0 + $0x26] sm:$0xff]
    %v114 = vld [vmem:[%s0 + $0x2e] sm:$0xff]
    %v115 = vld [vmem:[%s0 + $0x36] sm:$0xff]
    %v116 = vld [vmem:[%s0 + $0x3e] sm:$0xff]
    %v117 = vld [vmem:[%s0 + $0x46] sm:$0x3f]
    %v118 = vld [vmem:[%s0 + $0x4c] sm:$0xff]
    %v119 = vld [vmem:[%s0 + $0x54] sm:$0xff]
    %v120 = vld [vmem:[%s0 + $0x5c] sm:$0xff]
    %v121 = vld [vmem:[%s0 + $0x64] sm:$0xff]
    %v122 = vld [vmem:[%s0 + $0x6c] sm:$0x3f]
    %v123 = vld [vmem:[%s0 + $0x72] sm:$0xff]
    %v124 = vld [vmem:[%s0 + $0x7a] sm:$0xff]
    %v125 = vld [vmem:[%s0 + $0x82] sm:$0xff]
    %v126 = vld [vmem:[%s0 + $0x8a] sm:$0xff]
    %v127 = vld [vmem:[%s0 + $0x92] sm:$0x3f]
    %v148 = vcombine.low %v108, %v113
    %v149 = vcombine.high %v108, %v113
    %v150 = vcombine.low %v118, %v123
    %v151 = vcombine.high %v118, %v123
    %v153 = vunpack.c.l.s4 1983009808
    %v154 = vunpack.c.0.s8 %v153
    %v155 = vlaneseq
    %v156 = vshrl.u32 %v155, 7
    %v157 = vsub.s32 %v154, %v156
    %v158 = vrot.slane %v148, %v157
    %v160 = vunpack.c.l.s4 1983009808
    %v161 = vunpack.c.0.s8 %v160
    %v162 = vlaneseq
    %v163 = vshrl.u32 %v162, 7
    %v164 = vsub.s32 %v161, %v163
    %v165 = vrot.slane %v149, %v164
    %v167 = vunpack.c.l.s4 1983009808
    %v168 = vunpack.c.0.s8 %v167
    %v169 = vlaneseq
    %v170 = vshrl.u32 %v169, 7
    %v171 = vsub.s32 %v168, %v170
    %v172 = vrot.slane %v150, %v171
    %v174 = vunpack.c.l.s4 1983009808
    %v175 = vunpack.c.0.s8 %v174
    %v176 = vlaneseq
    %v177 = vshrl.u32 %v176, 7
    %v178 = vsub.s32 %v175, %v177
    %v179 = vrot.slane %v151, %v178
    %v180 = vcombine.low %v158, %v172
    %v181 = vcombine.high %v158, %v172
    %v182 = vcombine.low %v165, %v179
    %v183 = vcombine.high %v165, %v179
    %v184 = vcombine.low %v109, %v114
    %v185 = vcombine.high %v109, %v114
    %v186 = vcombine.low %v119, %v124
    %v187 = vcombine.high %v119, %v124
    %v189 = vunpack.c.l.s4 1983009808
    %v190 = vunpack.c.0.s8 %v189
    %v191 = vlaneseq
    %v192 = vshrl.u32 %v191, 7
    %v193 = vsub.s32 %v190, %v192
    %v194 = vrot.slane %v184, %v193
    %v196 = vunpack.c.l.s4 1983009808
    %v197 = vunpack.c.0.s8 %v196
    %v198 = vlaneseq
    %v199 = vshrl.u32 %v198, 7
    %v200 = vsub.s32 %v197, %v199
    %v201 = vrot.slane %v185, %v200
    %v203 = vunpack.c.l.s4 1983009808
    %v204 = vunpack.c.0.s8 %v203
    %v205 = vlaneseq
    %v206 = vshrl.u32 %v205, 7
    %v207 = vsub.s32 %v204, %v206
    %v208 = vrot.slane %v186, %v207
    %v210 = vunpack.c.l.s4 1983009808
    %v211 = vunpack.c.0.s8 %v210
    %v212 = vlaneseq
    %v213 = vshrl.u32 %v212, 7
    %v214 = vsub.s32 %v211, %v213
    %v215 = vrot.slane %v187, %v214
    %v216 = vcombine.low %v194, %v208
    %v217 = vcombine.high %v194, %v208
    %v218 = vcombine.low %v201, %v215
    %v219 = vcombine.high %v201, %v215
    %v220 = vcombine.low %v110, %v115
    %v221 = vcombine.high %v110, %v115
    %v222 = vcombine.low %v120, %v125
    %v223 = vcombine.high %v120, %v125
    %v225 = vunpack.c.l.s4 1983009808
    %v226 = vunpack.c.0.s8 %v225
    %v227 = vlaneseq
    %v228 = vshrl.u32 %v227, 7
    %v229 = vsub.s32 %v226, %v228
    %v230 = vrot.slane %v220, %v229
    %v232 = vunpack.c.l.s4 1983009808
    %v233 = vunpack.c.0.s8 %v232
    %v234 = vlaneseq
    %v235 = vshrl.u32 %v234, 7
    %v236 = vsub.s32 %v233, %v235
    %v237 = vrot.slane %v221, %v236
    %v239 = vunpack.c.l.s4 1983009808
    %v240 = vunpack.c.0.s8 %v239
    %v241 = vlaneseq
    %v242 = vshrl.u32 %v241, 7
    %v243 = vsub.s32 %v240, %v242
    %v244 = vrot.slane %v222, %v243
    %v246 = vunpack.c.l.s4 1983009808
    %v247 = vunpack.c.0.s8 %v246
    %v248 = vlaneseq
    %v249 = vshrl.u32 %v248, 7
    %v250 = vsub.s32 %v247, %v249
    %v251 = vrot.slane %v223, %v250
    %v252 = vcombine.low %v230, %v244
    %v253 = vcombine.high %v230, %v244
    %v254 = vcombine.low %v237, %v251
    %v255 = vcombine.high %v237, %v251
    %v256 = vcombine.low %v111, %v116
    %v257 = vcombine.high %v111, %v116
    %v258 = vcombine.low %v121, %v126
    %v259 = vcombine.high %v121, %v126
    %v261 = vunpack.c.l.s4 1983009808
    %v262 = vunpack.c.0.s8 %v261
    %v263 = vlaneseq
    %v264 = vshrl.u32 %v263, 7
    %v265 = vsub.s32 %v262, %v264
    %v266 = vrot.slane %v256, %v265
    %v268 = vunpack.c.l.s4 1983009808
    %v269 = vunpack.c.0.s8 %v268
    %v270 = vlaneseq
    %v271 = vshrl.u32 %v270, 7
    %v272 = vsub.s32 %v269, %v271
    %v273 = vrot.slane %v257, %v272
    %v275 = vunpack.c.l.s4 1983009808
    %v276 = vunpack.c.0.s8 %v275
    %v277 = vlaneseq
    %v278 = vshrl.u32 %v277, 7
    %v279 = vsub.s32 %v276, %v278
    %v280 = vrot.slane %v258, %v279
    %v282 = vunpack.c.l.s4 1983009808
    %v283 = vunpack.c.0.s8 %v282
    %v284 = vlaneseq
    %v285 = vshrl.u32 %v284, 7
    %v286 = vsub.s32 %v283, %v285
    %v287 = vrot.slane %v259, %v286
    %v288 = vcombine.low %v266, %v280
    %v289 = vcombine.high %v266, %v280
    %v290 = vcombine.low %v273, %v287
    %v291 = vcombine.high %v273, %v287
    %v292 = vcombine.low %v112, %v117
    %v293 = vcombine.high %v112, %v117
    %v294 = vcombine.low %v122, %v127
    %v295 = vcombine.high %v122, %v127
    %v297 = vunpack.c.l.s4 1983009808
    %v298 = vunpack.c.0.s8 %v297
    %v299 = vlaneseq
    %v300 = vshrl.u32 %v299, 7
    %v301 = vsub.s32 %v298, %v300
    %v302 = vrot.slane %v292, %v301
    %v304 = vunpack.c.l.s4 1983009808
    %v305 = vunpack.c.0.s8 %v304
    %v306 = vlaneseq
    %v307 = vshrl.u32 %v306, 7
    %v308 = vsub.s32 %v305, %v307
    %v309 = vrot.slane %v293, %v308
    %v311 = vunpack.c.l.s4 1983009808
    %v312 = vunpack.c.0.s8 %v311
    %v313 = vlaneseq
    %v314 = vshrl.u32 %v313, 7
    %v315 = vsub.s32 %v312, %v314
    %v316 = vrot.slane %v294, %v315
    %v318 = vunpack.c.l.s4 1983009808
    %v319 = vunpack.c.0.s8 %v318
    %v320 = vlaneseq
    %v321 = vshrl.u32 %v320, 7
    %v322 = vsub.s32 %v319, %v321
    %v323 = vrot.slane %v295, %v322
    %v324 = vcombine.low %v302, %v316
    %v325 = vcombine.high %v302, %v316
    %v326 = vcombine.low %v309, %v323
    %v346 = vpack.c.bf16 %v180, %v180
    %v347 = vpack.c.bf16 %v181, %v181
    %v348 = vpack.c.bf16 %v182, %v182
    %v349 = vpack.c.bf16 %v183, %v183
    %v350 = vpack.c.bf16 %v216, %v216
    %v351 = vpack.c.bf16 %v217, %v217
    %v352 = vpack.c.bf16 %v218, %v218
    %v353 = vpack.c.bf16 %v219, %v219
    %v354 = vpack.c.bf16 %v252, %v252
    %v355 = vpack.c.bf16 %v253, %v253
    %v356 = vpack.c.bf16 %v254, %v254
    %v357 = vpack.c.bf16 %v255, %v255
    %v358 = vpack.c.bf16 %v288, %v288
    %v359 = vpack.c.bf16 %v289, %v289
    %v360 = vpack.c.bf16 %v290, %v290
    %v361 = vpack.c.bf16 %v291, %v291
    %v362 = vpack.c.bf16 %v324, %v324
    %v363 = vpack.c.bf16 %v325, %v325
    %v364 = vpack.c.bf16 %v326, %v326
    %v365 = vld [vmem:[#allocation2] sm:$0xff]
    %v366 = vld [vmem:[#allocation2 + $0x8] sm:$0xff]
    %v367 = vld [vmem:[#allocation2 + $0x10] sm:$0xff]
    %v368 = vld [vmem:[#allocation2 + $0x18] sm:$0xff]
    %v369 = vld [vmem:[#allocation2 + $0x20] sm:$0xff]
    %v370 = vld [vmem:[#allocation2 + $0x28] sm:$0xff]
    %v371 = vld [vmem:[#allocation2 + $0x30] sm:$0xff]
    %v372 = vld [vmem:[#allocation2 + $0x38] sm:$0xff]
    %v373 = vld [vmem:[#allocation2 + $0x40] sm:$0xff]
    %v374 = vld [vmem:[#allocation2 + $0x48] sm:$0xff]
    %v375 = vld [vmem:[#allocation2 + $0x50] sm:$0xff]
    %v376 = vld [vmem:[#allocation2 + $0x58] sm:$0xff]
    %v377 = vld [vmem:[#allocation2 + $0x60] sm:$0xff]
    %v378 = vld [vmem:[#allocation2 + $0x68] sm:$0xff]
    %v379 = vld [vmem:[#allocation2 + $0x70] sm:$0xff]
    %v380 = vld [vmem:[#allocation2 + $0x78] sm:$0xff]
    %v381 = vld [vmem:[#allocation2 + $0x80] sm:$0xff]
    %v382 = vld [vmem:[#allocation2 + $0x88] sm:$0xff]
    %v383 = vld [vmem:[#allocation2 + $0x90] sm:$0xff]
    %v384 = vld [vmem:[#allocation2 + $0x98] sm:$0xff]
    %v385 = vld [vmem:[#allocation2 + $0xa0] sm:$0xff]
    %v386 = vld [vmem:[#allocation2 + $0xa8] sm:$0xff]
    %v387 = vld [vmem:[#allocation2 + $0xb0] sm:$0xff]
    %v388 = vld [vmem:[#allocation2 + $0xb8] sm:$0xff]
    %v389 = vld [vmem:[#allocation2 + $0xc0] sm:$0xff]
    %v390 = vld [vmem:[#allocation2 + $0xc8] sm:$0xff]
    %v391 = vld [vmem:[#allocation2 + $0xd0] sm:$0xff]
    %v392 = vld [vmem:[#allocation2 + $0xd8] sm:$0xff]
    %v393 = vld [vmem:[#allocation2 + $0xe0] sm:$0xff]
    %v394 = vld [vmem:[#allocation2 + $0xe8] sm:$0xff]
    %v395 = vld [vmem:[#allocation2 + $0xf0] sm:$0xff]
    %v396 = vld [vmem:[#allocation2 + $0xf8] sm:$0xff]
    %v397 = vld [vmem:[#allocation2 + $0x100] sm:$0xff]
    %v398 = vld [vmem:[#allocation2 + $0x108] sm:$0xff]
    %v399 = vld [vmem:[#allocation2 + $0x110] sm:$0xff]
    %v400 = vld [vmem:[#allocation2 + $0x118] sm:$0xff]
    %v401 = vld [vmem:[#allocation2 + $0x120] sm:$0xff]
    %v402 = vld [vmem:[#allocation2 + $0x128] sm:$0xff]
    %v403 = vld [vmem:[#allocation2 + $0x130] sm:$0xff]
    %v404 = vld [vmem:[#allocation2 + $0x138] sm:$0xff]
    %v405 = vld [vmem:[#allocation2 + $0x140] sm:$0xff]
    %v406 = vld [vmem:[#allocation2 + $0x148] sm:$0xff]
    %v407 = vld [vmem:[#allocation2 + $0x150] sm:$0xff]
    %v408 = vld [vmem:[#allocation2 + $0x158] sm:$0xff]
    %v409 = vld [vmem:[#allocation2 + $0x160] sm:$0xff]
    %v410 = vld [vmem:[#allocation2 + $0x168] sm:$0xff]
    %v411 = vld [vmem:[#allocation2 + $0x170] sm:$0xff]
    %v412 = vld [vmem:[#allocation2 + $0x178] sm:$0xff]
    %v413 = vld [vmem:[#allocation2 + $0x180] sm:$0xff]
    %v414 = vld [vmem:[#allocation2 + $0x188] sm:$0xff]
    %v415 = vld [vmem:[#allocation2 + $0x190] sm:$0xff]
    %v416 = vld [vmem:[#allocation2 + $0x198] sm:$0xff]
    %v417 = vld [vmem:[#allocation2 + $0x1a0] sm:$0xff]
    %v418 = vld [vmem:[#allocation2 + $0x1a8] sm:$0xff]
    %v419 = vld [vmem:[#allocation2 + $0x1b0] sm:$0xff]
    %v420 = vld [vmem:[#allocation2 + $0x1b8] sm:$0xff]
    %v421 = vld [vmem:[#allocation2 + $0x1c0] sm:$0xff]
    %v422 = vld [vmem:[#allocation2 + $0x1c8] sm:$0xff]
    %v423 = vld [vmem:[#allocation2 + $0x1d0] sm:$0xff]
    %v424 = vld [vmem:[#allocation2 + $0x1d8] sm:$0xff]
    %v425 = vld [vmem:[#allocation2 + $0x1e0] sm:$0xff]
    %v426 = vld [vmem:[#allocation2 + $0x1e8] sm:$0xff]
    %v427 = vld [vmem:[#allocation2 + $0x1f0] sm:$0xff]
    %v428 = vld [vmem:[#allocation2 + $0x1f8] sm:$0xff]
    %v429 = vld [vmem:[#allocation2 + $0x200] sm:$0xff]
    %v430 = vld [vmem:[#allocation2 + $0x208] sm:$0xff]
    %v431 = vld [vmem:[#allocation2 + $0x210] sm:$0xff]
    %v432 = vld [vmem:[#allocation2 + $0x218] sm:$0xff]
    %v433 = vld [vmem:[#allocation2 + $0x220] sm:$0xff]
    %v434 = vld [vmem:[#allocation2 + $0x228] sm:$0xff]
    %v435 = vld [vmem:[#allocation2 + $0x230] sm:$0xff]
    %v436 = vld [vmem:[#allocation2 + $0x238] sm:$0xff]
    %v437 = vld [vmem:[#allocation2 + $0x240] sm:$0xff]
    %v438 = vld [vmem:[#allocation2 + $0x248] sm:$0xff]
    %v439 = vld [vmem:[#allocation2 + $0x250] sm:$0xff]
    %v440 = vld [vmem:[#allocation2 + $0x258] sm:$0xff]
    %v441 = vld [vmem:[#allocation2 + $0x260] sm:$0xff]
    %v442 = vld [vmem:[#allocation2 + $0x268] sm:$0xff]
    %v443 = vld [vmem:[#allocation2 + $0x270] sm:$0xff]
    %v444 = vld [vmem:[#allocation2 + $0x278] sm:$0xff]
    %v445 = vld [vmem:[#allocation2 + $0x280] sm:$0xff]
    %v446 = vld [vmem:[#allocation2 + $0x288] sm:$0xff]
    %v447 = vld [vmem:[#allocation2 + $0x290] sm:$0xff]
    %v448 = vld [vmem:[#allocation2 + $0x298] sm:$0xff]
    %v449 = vld [vmem:[#allocation2 + $0x2a0] sm:$0xff]
    %v450 = vld [vmem:[#allocation2 + $0x2a8] sm:$0xff]
    %v451 = vld [vmem:[#allocation2 + $0x2b0] sm:$0xff]
    %v452 = vld [vmem:[#allocation2 + $0x2b8] sm:$0xff]
    %v453 = vld [vmem:[#allocation2 + $0x2c0] sm:$0xff]
    %v454 = vld [vmem:[#allocation2 + $0x2c8] sm:$0xff]
    %v455 = vld [vmem:[#allocation2 + $0x2d0] sm:$0xff]
    %v456 = vld [vmem:[#allocation2 + $0x2d8] sm:$0xff]
    %v457 = vld [vmem:[#allocation2 + $0x2e0] sm:$0xff]
    %v458 = vld [vmem:[#allocation2 + $0x2e8] sm:$0xff]
    %v459 = vld [vmem:[#allocation2 + $0x2f0] sm:$0xff]
    %v460 = vld [vmem:[#allocation2 + $0x2f8] sm:$0xff]
    %v461 = vld [vmem:[#allocation2 + $0x300] sm:$0xff]
    %v462 = vld [vmem:[#allocation2 + $0x308] sm:$0xff]
    %v463 = vld [vmem:[#allocation2 + $0x310] sm:$0xff]
    %v464 = vld [vmem:[#allocation2 + $0x318] sm:$0xff]
    %v465 = vld [vmem:[#allocation2 + $0x320] sm:$0xff]
    %v466 = vld [vmem:[#allocation2 + $0x328] sm:$0xff]
    %v467 = vld [vmem:[#allocation2 + $0x330] sm:$0xff]
    %v468 = vld [vmem:[#allocation2 + $0x338] sm:$0xff]
    %v469 = vld [vmem:[#allocation2 + $0x340] sm:$0xff]
    %v470 = vld [vmem:[#allocation2 + $0x348] sm:$0xff]
    %v471 = vld [vmem:[#allocation2 + $0x350] sm:$0xff]
    %v472 = vld [vmem:[#allocation2 + $0x358] sm:$0xff]
    %v473 = vld [vmem:[#allocation2 + $0x360] sm:$0xff]
    %v474 = vld [vmem:[#allocation2 + $0x368] sm:$0xff]
    %v475 = vld [vmem:[#allocation2 + $0x370] sm:$0xff]
    %v476 = vld [vmem:[#allocation2 + $0x378] sm:$0xff]
    %v477 = vld [vmem:[#allocation2 + $0x380] sm:$0xff]
    %v478 = vld [vmem:[#allocation2 + $0x388] sm:$0xff]
    %v479 = vld [vmem:[#allocation2 + $0x390] sm:$0xff]
    %v480 = vld [vmem:[#allocation2 + $0x398] sm:$0xff]
    %v481 = vld [vmem:[#allocation2 + $0x3a0] sm:$0xff]
    %v482 = vld [vmem:[#allocation2 + $0x3a8] sm:$0xff]
    %v483 = vld [vmem:[#allocation2 + $0x3b0] sm:$0xff]
    %v484 = vld [vmem:[#allocation2 + $0x3b8] sm:$0xff]
    %v485 = vld [vmem:[#allocation2 + $0x3c0] sm:$0xff]
    %v486 = vld [vmem:[#allocation2 + $0x3c8] sm:$0xff]
    %v487 = vld [vmem:[#allocation2 + $0x3d0] sm:$0xff]
    %v488 = vld [vmem:[#allocation2 + $0x3d8] sm:$0xff]
    %v489 = vld [vmem:[#allocation2 + $0x3e0] sm:$0xff]
    %v490 = vld [vmem:[#allocation2 + $0x3e8] sm:$0xff]
    %v491 = vld [vmem:[#allocation2 + $0x3f0] sm:$0xff]
    %v492 = vld [vmem:[#allocation2 + $0x3f8] sm:$0xff]
    %v493 = vld [vmem:[#allocation2 + $0x400] sm:$0xff]
    %v494 = vld [vmem:[#allocation2 + $0x408] sm:$0xff]
    %v495 = vld [vmem:[#allocation2 + $0x410] sm:$0xff]
    %v496 = vld [vmem:[#allocation2 + $0x418] sm:$0xff]
    %v497 = vld [vmem:[#allocation2 + $0x420] sm:$0xff]
    %v498 = vld [vmem:[#allocation2 + $0x428] sm:$0xff]
    %v499 = vld [vmem:[#allocation2 + $0x430] sm:$0xff]
    %v500 = vld [vmem:[#allocation2 + $0x438] sm:$0xff]
    %v501 = vld [vmem:[#allocation2 + $0x440] sm:$0xff]
    %v502 = vld [vmem:[#allocation2 + $0x448] sm:$0xff]
    %v503 = vld [vmem:[#allocation2 + $0x450] sm:$0xff]
    %v504 = vld [vmem:[#allocation2 + $0x458] sm:$0xff]
    %v505 = vld [vmem:[#allocation2 + $0x460] sm:$0xff]
    %v506 = vld [vmem:[#allocation2 + $0x468] sm:$0xff]
    %v507 = vld [vmem:[#allocation2 + $0x470] sm:$0xff]
    %v508 = vld [vmem:[#allocation2 + $0x478] sm:$0xff]
    %v509 = vld [vmem:[#allocation2 + $0x480] sm:$0xff]
    %v510 = vld [vmem:[#allocation2 + $0x488] sm:$0xff]
    %v511 = vld [vmem:[#allocation2 + $0x490] sm:$0xff]
    %v512 = vld [vmem:[#allocation2 + $0x498] sm:$0xff]
    %v513 = vld [vmem:[#allocation2 + $0x4a0] sm:$0xff]
    %v514 = vld [vmem:[#allocation2 + $0x4a8] sm:$0xff]
    %v515 = vld [vmem:[#allocation2 + $0x4b0] sm:$0xff]
    %v516 = vld [vmem:[#allocation2 + $0x4b8] sm:$0xff]
    %v517 = vld [vmem:[#allocation2 + $0x4c0] sm:$0xff]
    %v518 = vld [vmem:[#allocation2 + $0x4c8] sm:$0xff]
    %v519 = vld [vmem:[#allocation2 + $0x4d0] sm:$0xff]
    %v520 = vld [vmem:[#allocation2 + $0x4d8] sm:$0xff]
    %v521 = vld [vmem:[#allocation2 + $0x4e0] sm:$0xff]
    %v522 = vld [vmem:[#allocation2 + $0x4e8] sm:$0xff]
    %v523 = vld [vmem:[#allocation2 + $0x4f0] sm:$0xff]
    %v524 = vld [vmem:[#allocation2 + $0x4f8] sm:$0xff]
    %v525 = vld [vmem:[#allocation2 + $0x500] sm:$0xff]
    %v526 = vld [vmem:[#allocation2 + $0x508] sm:$0xff]
    %v527 = vld [vmem:[#allocation2 + $0x510] sm:$0xff]
    %v528 = vld [vmem:[#allocation2 + $0x518] sm:$0xff]
    %v529 = vld [vmem:[#allocation2 + $0x520] sm:$0xff]
    %v530 = vld [vmem:[#allocation2 + $0x528] sm:$0xff]
    %v531 = vld [vmem:[#allocation2 + $0x530] sm:$0xff]
    %v532 = vld [vmem:[#allocation2 + $0x538] sm:$0xff]
    %v533 = vld [vmem:[#allocation2 + $0x540] sm:$0xff]
    %v534 = vld [vmem:[#allocation2 + $0x548] sm:$0xff]
    %v535 = vld [vmem:[#allocation2 + $0x550] sm:$0xff]
    %v536 = vld [vmem:[#allocation2 + $0x558] sm:$0xff]
    %v537 = vld [vmem:[#allocation2 + $0x560] sm:$0xff]
    %v538 = vld [vmem:[#allocation2 + $0x568] sm:$0xff]
    %v539 = vld [vmem:[#allocation2 + $0x570] sm:$0xff]
    %v540 = vld [vmem:[#allocation2 + $0x578] sm:$0xff]
    %v541 = vld [vmem:[#allocation2 + $0x580] sm:$0xff]
    %v542 = vld [vmem:[#allocation2 + $0x588] sm:$0xff]
    %v543 = vld [vmem:[#allocation2 + $0x590] sm:$0xff]
    %v544 = vld [vmem:[#allocation2 + $0x598] sm:$0xff]
    %v545 = vld [vmem:[#allocation2 + $0x5a0] sm:$0xff]
    %v546 = vld [vmem:[#allocation2 + $0x5a8] sm:$0xff]
    %v547 = vld [vmem:[#allocation2 + $0x5b0] sm:$0xff]
    %v548 = vld [vmem:[#allocation2 + $0x5b8] sm:$0xff]
    %v549 = vld [vmem:[#allocation2 + $0x5c0] sm:$0xff]
    %v550 = vld [vmem:[#allocation2 + $0x5c8] sm:$0xff]
    %v551 = vld [vmem:[#allocation2 + $0x5d0] sm:$0xff]
    %v552 = vld [vmem:[#allocation2 + $0x5d8] sm:$0xff]
    %v553 = vld [vmem:[#allocation2 + $0x5e0] sm:$0xff]
    %v554 = vld [vmem:[#allocation2 + $0x5e8] sm:$0xff]
    %v555 = vld [vmem:[#allocation2 + $0x5f0] sm:$0xff]
    %v556 = vld [vmem:[#allocation2 + $0x5f8] sm:$0xff]
    %v557 = vld [vmem:[#allocation2 + $0x600] sm:$0xff]
    %v558 = vld [vmem:[#allocation2 + $0x608] sm:$0xff]
    %v559 = vld [vmem:[#allocation2 + $0x610] sm:$0xff]
    %v560 = vld [vmem:[#allocation2 + $0x618] sm:$0xff]
    %v561 = vld [vmem:[#allocation2 + $0x620] sm:$0xff]
    %v562 = vld [vmem:[#allocation2 + $0x628] sm:$0xff]
    %v563 = vld [vmem:[#allocation2 + $0x630] sm:$0xff]
    %v564 = vld [vmem:[#allocation2 + $0x638] sm:$0xff]
    %v565 = vld [vmem:[#allocation2 + $0x640] sm:$0xff]
    %v566 = vld [vmem:[#allocation2 + $0x648] sm:$0xff]
    %v567 = vld [vmem:[#allocation2 + $0x650] sm:$0xff]
    %v568 = vld [vmem:[#allocation2 + $0x658] sm:$0xff]
    %v569 = vld [vmem:[#allocation2 + $0x660] sm:$0xff]
    %v570 = vld [vmem:[#allocation2 + $0x668] sm:$0xff]
    %v571 = vld [vmem:[#allocation2 + $0x670] sm:$0xff]
    %v572 = vld [vmem:[#allocation2 + $0x678] sm:$0xff]
    %v573 = vld [vmem:[#allocation2 + $0x680] sm:$0xff]
    %v574 = vld [vmem:[#allocation2 + $0x688] sm:$0xff]
    %v575 = vld [vmem:[#allocation2 + $0x690] sm:$0xff]
    %v576 = vld [vmem:[#allocation2 + $0x698] sm:$0xff]
    %v577 = vld [vmem:[#allocation2 + $0x6a0] sm:$0xff]
    %v578 = vld [vmem:[#allocation2 + $0x6a8] sm:$0xff]
    %v579 = vld [vmem:[#allocation2 + $0x6b0] sm:$0xff]
    %v580 = vld [vmem:[#allocation2 + $0x6b8] sm:$0xff]
    %v581 = vld [vmem:[#allocation2 + $0x6c0] sm:$0xff]
    %v582 = vld [vmem:[#allocation2 + $0x6c8] sm:$0xff]
    %v583 = vld [vmem:[#allocation2 + $0x6d0] sm:$0xff]
    %v584 = vld [vmem:[#allocation2 + $0x6d8] sm:$0xff]
    %v585 = vld [vmem:[#allocation2 + $0x6e0] sm:$0xff]
    %v586 = vld [vmem:[#allocation2 + $0x6e8] sm:$0xff]
    %v587 = vld [vmem:[#allocation2 + $0x6f0] sm:$0xff]
    %v588 = vld [vmem:[#allocation2 + $0x6f8] sm:$0xff]
    %v589 = vld [vmem:[#allocation2 + $0x700] sm:$0xff]
    %v590 = vld [vmem:[#allocation2 + $0x708] sm:$0xff]
    %v591 = vld [vmem:[#allocation2 + $0x710] sm:$0xff]
    %v592 = vld [vmem:[#allocation2 + $0x718] sm:$0xff]
    %v593 = vld [vmem:[#allocation2 + $0x720] sm:$0xff]
    %v594 = vld [vmem:[#allocation2 + $0x728] sm:$0xff]
    %v595 = vld [vmem:[#allocation2 + $0x730] sm:$0xff]
    %v596 = vld [vmem:[#allocation2 + $0x738] sm:$0xff]
    %v597 = vld [vmem:[#allocation2 + $0x740] sm:$0xff]
    %v598 = vld [vmem:[#allocation2 + $0x748] sm:$0xff]
    %v599 = vld [vmem:[#allocation2 + $0x750] sm:$0xff]
    %v600 = vld [vmem:[#allocation2 + $0x758] sm:$0xff]
    %v601 = vld [vmem:[#allocation2 + $0x760] sm:$0xff]
    %v602 = vld [vmem:[#allocation2 + $0x768] sm:$0xff]
    %v603 = vld [vmem:[#allocation2 + $0x770] sm:$0xff]
    %v604 = vld [vmem:[#allocation2 + $0x778] sm:$0xff]
    %v605 = vld [vmem:[#allocation2 + $0x780] sm:$0xff]
    %v606 = vld [vmem:[#allocation2 + $0x788] sm:$0xff]
    %v607 = vld [vmem:[#allocation2 + $0x790] sm:$0xff]
    %v608 = vld [vmem:[#allocation2 + $0x798] sm:$0xff]
    %v609 = vld [vmem:[#allocation2 + $0x7a0] sm:$0xff]
    %v610 = vld [vmem:[#allocation2 + $0x7a8] sm:$0xff]
    %v611 = vld [vmem:[#allocation2 + $0x7b0] sm:$0xff]
    %v612 = vld [vmem:[#allocation2 + $0x7b8] sm:$0xff]
    %v613 = vld [vmem:[#allocation2 + $0x7c0] sm:$0xff]
    %v614 = vld [vmem:[#allocation2 + $0x7c8] sm:$0xff]
    %v615 = vld [vmem:[#allocation2 + $0x7d0] sm:$0xff]
    %v616 = vld [vmem:[#allocation2 + $0x7d8] sm:$0xff]
    %v617 = vld [vmem:[#allocation2 + $0x7e0] sm:$0xff]
    %v618 = vld [vmem:[#allocation2 + $0x7e8] sm:$0xff]
    %v619 = vld [vmem:[#allocation2 + $0x7f0] sm:$0xff]
    %v620 = vld [vmem:[#allocation2 + $0x7f8] sm:$0xff]
    %v621 = vld [vmem:[#allocation2 + $0x800] sm:$0xff]
    %v622 = vld [vmem:[#allocation2 + $0x808] sm:$0xff]
    %v623 = vld [vmem:[#allocation2 + $0x810] sm:$0xff]
    %v624 = vld [vmem:[#allocation2 + $0x818] sm:$0xff]
    %v625 = vld [vmem:[#allocation2 + $0x820] sm:$0xff]
    %v626 = vld [vmem:[#allocation2 + $0x828] sm:$0xff]
    %v627 = vld [vmem:[#allocation2 + $0x830] sm:$0xff]
    %v628 = vld [vmem:[#allocation2 + $0x838] sm:$0xff]
    %v629 = vld [vmem:[#allocation2 + $0x840] sm:$0xff]
    %v630 = vld [vmem:[#allocation2 + $0x848] sm:$0xff]
    %v631 = vld [vmem:[#allocation2 + $0x850] sm:$0xff]
    %v632 = vld [vmem:[#allocation2 + $0x858] sm:$0xff]
    %v633 = vld [vmem:[#allocation2 + $0x860] sm:$0xff]
    %v634 = vld [vmem:[#allocation2 + $0x868] sm:$0xff]
    %v635 = vld [vmem:[#allocation2 + $0x870] sm:$0xff]
    %v636 = vld [vmem:[#allocation2 + $0x878] sm:$0xff]
    %v637 = vld [vmem:[#allocation2 + $0x880] sm:$0xff]
    %v638 = vld [vmem:[#allocation2 + $0x888] sm:$0xff]
    %v639 = vld [vmem:[#allocation2 + $0x890] sm:$0xff]
    %v640 = vld [vmem:[#allocation2 + $0x898] sm:$0xff]
    %v641 = vld [vmem:[#allocation2 + $0x8a0] sm:$0xff]
    %v642 = vld [vmem:[#allocation2 + $0x8a8] sm:$0xff]
    %v643 = vld [vmem:[#allocation2 + $0x8b0] sm:$0xff]
    %v644 = vld [vmem:[#allocation2 + $0x8b8] sm:$0xff]
    %v645 = vld [vmem:[#allocation2 + $0x8c0] sm:$0xff]
    %v646 = vld [vmem:[#allocation2 + $0x8c8] sm:$0xff]
    %v647 = vld [vmem:[#allocation2 + $0x8d0] sm:$0xff]
    %v648 = vld [vmem:[#allocation2 + $0x8d8] sm:$0xff]
    %v649 = vld [vmem:[#allocation2 + $0x8e0] sm:$0xff]
    %v650 = vld [vmem:[#allocation2 + $0x8e8] sm:$0xff]
    %v651 = vld [vmem:[#allocation2 + $0x8f0] sm:$0xff]
    %v652 = vld [vmem:[#allocation2 + $0x8f8] sm:$0xff]
    %v653 = vld [vmem:[#allocation2 + $0x900] sm:$0xff]
    %v654 = vld [vmem:[#allocation2 + $0x908] sm:$0xff]
    %v655 = vld [vmem:[#allocation2 + $0x910] sm:$0xff]
    %v656 = vld [vmem:[#allocation2 + $0x918] sm:$0xff]
    %v657 = vld [vmem:[#allocation2 + $0x920] sm:$0xff]
    %v658 = vld [vmem:[#allocation2 + $0x928] sm:$0xff]
    %v659 = vld [vmem:[#allocation5] sm:$0x3]
    %v661 = vlaneseq
    %v662 = vshrl.u32 %v661, 7
    %v663 = vsub.s32 0, %v662
    %v664 = vrot.slane %v659, %v663
    %v665 = vlaneseq
    %v666 = vshrl.u32 %v665, 7
    %v667 = vsub.s32 1, %v666
    %v668 = vrot.slane %v659, %v667
    %v965 = vunpack.c.l.b16 %v365
    %v966 = vunpack.c.h.b16 %v365
    %v967 = vunpack.c.l.b16 %v366
    %v968 = vunpack.c.h.b16 %v366
    %v969 = vunpack.c.l.b16 %v367
    %v970 = vunpack.c.h.b16 %v367
    %v971 = vunpack.c.l.b16 %v368
    %v972 = vunpack.c.h.b16 %v368
    %v973 = vunpack.c.l.b16 %v369
    %v974 = vunpack.c.h.b16 %v369
    %v975 = vunpack.c.l.b16 %v370
    %v976 = vunpack.c.h.b16 %v370
    %v977 = vunpack.c.l.b16 %v371
    %v978 = vunpack.c.h.b16 %v371
    %v979 = vunpack.c.l.b16 %v372
    %v980 = vunpack.c.h.b16 %v372
    %v981 = vunpack.c.l.b16 %v373
    %v982 = vunpack.c.h.b16 %v373
    %v983 = vunpack.c.l.b16 %v374
    %v984 = vunpack.c.h.b16 %v374
    %v985 = vunpack.c.l.b16 %v375
    %v986 = vunpack.c.h.b16 %v375
    %v987 = vunpack.c.l.b16 %v376
    %v988 = vunpack.c.h.b16 %v376
    %v989 = vunpack.c.l.b16 %v377
    %v990 = vunpack.c.h.b16 %v377
    %v991 = vunpack.c.l.b16 %v378
    %v992 = vunpack.c.h.b16 %v378
    %v993 = vunpack.c.l.b16 %v379
    %v994 = vunpack.c.h.b16 %v379
    %v995 = vunpack.c.l.b16 %v380
    %v996 = vunpack.c.h.b16 %v380
    %v997 = vunpack.c.l.b16 %v381
    %v998 = vunpack.c.h.b16 %v381
    %v999 = vunpack.c.l.b16 %v382
    %v1000 = vunpack.c.h.b16 %v382
    %v1001 = vunpack.c.l.b16 %v383
    %v1002 = vunpack.c.h.b16 %v383
    %v1003 = vunpack.c.l.b16 %v384
    %v1004 = vunpack.c.h.b16 %v384
    %v1005 = vunpack.c.l.b16 %v385
    %v1006 = vunpack.c.h.b16 %v385
    %v1007 = vunpack.c.l.b16 %v386
    %v1008 = vunpack.c.h.b16 %v386
    %v1009 = vunpack.c.l.b16 %v387
    %v1010 = vunpack.c.h.b16 %v387
    %v1011 = vunpack.c.l.b16 %v388
    %v1012 = vunpack.c.h.b16 %v388
    %v1013 = vunpack.c.l.b16 %v389
    %v1014 = vunpack.c.h.b16 %v389
    %v1015 = vunpack.c.l.b16 %v390
    %v1016 = vunpack.c.h.b16 %v390
    %v1017 = vunpack.c.l.b16 %v391
    %v1018 = vunpack.c.h.b16 %v391
    %v1019 = vunpack.c.l.b16 %v392
    %v1020 = vunpack.c.h.b16 %v392
    %v1021 = vunpack.c.l.b16 %v393
    %v1022 = vunpack.c.h.b16 %v393
    %v1023 = vunpack.c.l.b16 %v394
    %v1024 = vunpack.c.h.b16 %v394
    %v1025 = vunpack.c.l.b16 %v395
    %v1026 = vunpack.c.h.b16 %v395
    %v1027 = vunpack.c.l.b16 %v396
    %v1028 = vunpack.c.h.b16 %v396
    %v1029 = vunpack.c.l.b16 %v397
    %v1030 = vunpack.c.h.b16 %v397
    %v1031 = vunpack.c.l.b16 %v398
    %v1032 = vunpack.c.h.b16 %v398
    %v1033 = vunpack.c.l.b16 %v399
    %v1034 = vunpack.c.h.b16 %v399
    %v1035 = vunpack.c.l.b16 %v400
    %v1036 = vunpack.c.h.b16 %v400
    %v1037 = vunpack.c.l.b16 %v401
    %v1038 = vunpack.c.h.b16 %v401
    %v1039 = vunpack.c.l.b16 %v402
    %v1040 = vunpack.c.h.b16 %v402
    %v1041 = vunpack.c.l.b16 %v403
    %v1042 = vunpack.c.h.b16 %v403
    %v1043 = vunpack.c.l.b16 %v404
    %v1044 = vunpack.c.h.b16 %v404
    %v1045 = vunpack.c.l.b16 %v405
    %v1046 = vunpack.c.h.b16 %v405
    %v1047 = vunpack.c.l.b16 %v406
    %v1048 = vunpack.c.h.b16 %v406
    %v1049 = vunpack.c.l.b16 %v407
    %v1050 = vunpack.c.h.b16 %v407
    %v1051 = vunpack.c.l.b16 %v408
    %v1052 = vunpack.c.h.b16 %v408
    %v1053 = vunpack.c.l.b16 %v409
    %v1054 = vunpack.c.h.b16 %v409
    %v1055 = vunpack.c.l.b16 %v410
    %v1056 = vunpack.c.h.b16 %v410
    %v1057 = vunpack.c.l.b16 %v411
    %v1058 = vunpack.c.h.b16 %v411
    %v1059 = vunpack.c.l.b16 %v412
    %v1060 = vunpack.c.h.b16 %v412
    %v1061 = vunpack.c.l.b16 %v413
    %v1062 = vunpack.c.h.b16 %v413
    %v1063 = vunpack.c.l.b16 %v414
    %v1064 = vunpack.c.h.b16 %v414
    %v1065 = vunpack.c.l.b16 %v415
    %v1066 = vunpack.c.h.b16 %v415
    %v1067 = vunpack.c.l.b16 %v416
    %v1068 = vunpack.c.h.b16 %v416
    %v1069 = vunpack.c.l.b16 %v417
    %v1070 = vunpack.c.h.b16 %v417
    %v1071 = vunpack.c.l.b16 %v418
    %v1072 = vunpack.c.h.b16 %v418
    %v1073 = vunpack.c.l.b16 %v419
    %v1074 = vunpack.c.h.b16 %v419
    %v1075 = vunpack.c.l.b16 %v420
    %v1076 = vunpack.c.h.b16 %v420
    %v1077 = vunpack.c.l.b16 %v421
    %v1078 = vunpack.c.h.b16 %v421
    %v1079 = vunpack.c.l.b16 %v422
    %v1080 = vunpack.c.h.b16 %v422
    %v1081 = vunpack.c.l.b16 %v423
    %v1082 = vunpack.c.h.b16 %v423
    %v1083 = vunpack.c.l.b16 %v424
    %v1084 = vunpack.c.h.b16 %v424
    %v1085 = vunpack.c.l.b16 %v425
    %v1086 = vunpack.c.h.b16 %v425
    %v1087 = vunpack.c.l.b16 %v426
    %v1088 = vunpack.c.h.b16 %v426
    %v1089 = vunpack.c.l.b16 %v427
    %v1090 = vunpack.c.h.b16 %v427
    %v1091 = vunpack.c.l.b16 %v428
    %v1092 = vunpack.c.h.b16 %v428
    %v1093 = vunpack.c.l.b16 %v429
    %v1094 = vunpack.c.h.b16 %v429
    %v1095 = vunpack.c.l.b16 %v430
    %v1096 = vunpack.c.h.b16 %v430
    %v1097 = vunpack.c.l.b16 %v431
    %v1098 = vunpack.c.h.b16 %v431
    %v1099 = vunpack.c.l.b16 %v432
    %v1100 = vunpack.c.h.b16 %v432
    %v1101 = vunpack.c.l.b16 %v433
    %v1102 = vunpack.c.h.b16 %v433
    %v1103 = vunpack.c.l.b16 %v434
    %v1104 = vunpack.c.h.b16 %v434
    %v1105 = vunpack.c.l.b16 %v435
    %v1106 = vunpack.c.h.b16 %v435
    %v1107 = vunpack.c.l.b16 %v436
    %v1108 = vunpack.c.h.b16 %v436
    %v1109 = vunpack.c.l.b16 %v437
    %v1110 = vunpack.c.h.b16 %v437
    %v1111 = vunpack.c.l.b16 %v438
    %v1112 = vunpack.c.h.b16 %v438
    %v1113 = vunpack.c.l.b16 %v439
    %v1114 = vunpack.c.h.b16 %v439
    %v1115 = vunpack.c.l.b16 %v440
    %v1116 = vunpack.c.h.b16 %v440
    %v1117 = vunpack.c.l.b16 %v441
    %v1118 = vunpack.c.h.b16 %v441
    %v1119 = vunpack.c.l.b16 %v442
    %v1120 = vunpack.c.h.b16 %v442
    %v1121 = vunpack.c.l.b16 %v443
    %v1122 = vunpack.c.h.b16 %v443
    %v1123 = vunpack.c.l.b16 %v444
    %v1124 = vunpack.c.h.b16 %v444
    %v1125 = vunpack.c.l.b16 %v445
    %v1126 = vunpack.c.h.b16 %v445
    %v1127 = vunpack.c.l.b16 %v446
    %v1128 = vunpack.c.h.b16 %v446
    %v1129 = vunpack.c.l.b16 %v447
    %v1130 = vunpack.c.h.b16 %v447
    %v1131 = vunpack.c.l.b16 %v448
    %v1132 = vunpack.c.h.b16 %v448
    %v1133 = vunpack.c.l.b16 %v449
    %v1134 = vunpack.c.h.b16 %v449
    %v1135 = vunpack.c.l.b16 %v450
    %v1136 = vunpack.c.h.b16 %v450
    %v1137 = vunpack.c.l.b16 %v451
    %v1138 = vunpack.c.h.b16 %v451
    %v1139 = vunpack.c.l.b16 %v452
    %v1140 = vunpack.c.h.b16 %v452
    %v1141 = vunpack.c.l.b16 %v453
    %v1142 = vunpack.c.h.b16 %v453
    %v1143 = vunpack.c.l.b16 %v454
    %v1144 = vunpack.c.h.b16 %v454
    %v1145 = vunpack.c.l.b16 %v455
    %v1146 = vunpack.c.h.b16 %v455
    %v1147 = vunpack.c.l.b16 %v456
    %v1148 = vunpack.c.h.b16 %v456
    %v1149 = vunpack.c.l.b16 %v457
    %v1150 = vunpack.c.h.b16 %v457
    %v1151 = vunpack.c.l.b16 %v458
    %v1152 = vunpack.c.h.b16 %v458
    %v1153 = vunpack.c.l.b16 %v459
    %v1154 = vunpack.c.h.b16 %v459
    %v1155 = vunpack.c.l.b16 %v460
    %v1156 = vunpack.c.h.b16 %v460
    %v1157 = vunpack.c.l.b16 %v461
    %v1158 = vunpack.c.h.b16 %v461
    %v1159 = vunpack.c.l.b16 %v462
    %v1160 = vunpack.c.h.b16 %v462
    %v1161 = vunpack.c.l.b16 %v463
    %v1162 = vunpack.c.h.b16 %v463
    %v1163 = vunpack.c.l.b16 %v464
    %v1164 = vunpack.c.h.b16 %v464
    %v1165 = vunpack.c.l.b16 %v465
    %v1166 = vunpack.c.h.b16 %v465
    %v1167 = vunpack.c.l.b16 %v466
    %v1168 = vunpack.c.h.b16 %v466
    %v1169 = vunpack.c.l.b16 %v467
    %v1170 = vunpack.c.h.b16 %v467
    %v1171 = vunpack.c.l.b16 %v468
    %v1172 = vunpack.c.h.b16 %v468
    %v1173 = vunpack.c.l.b16 %v469
    %v1174 = vunpack.c.h.b16 %v469
    %v1175 = vunpack.c.l.b16 %v470
    %v1176 = vunpack.c.h.b16 %v470
    %v1177 = vunpack.c.l.b16 %v471
    %v1178 = vunpack.c.h.b16 %v471
    %v1179 = vunpack.c.l.b16 %v472
    %v1180 = vunpack.c.h.b16 %v472
    %v1181 = vunpack.c.l.b16 %v473
    %v1182 = vunpack.c.h.b16 %v473
    %v1183 = vunpack.c.l.b16 %v474
    %v1184 = vunpack.c.h.b16 %v474
    %v1185 = vunpack.c.l.b16 %v475
    %v1186 = vunpack.c.h.b16 %v475
    %v1187 = vunpack.c.l.b16 %v476
    %v1188 = vunpack.c.h.b16 %v476
    %v1189 = vunpack.c.l.b16 %v477
    %v1190 = vunpack.c.h.b16 %v477
    %v1191 = vunpack.c.l.b16 %v478
    %v1192 = vunpack.c.h.b16 %v478
    %v1193 = vunpack.c.l.b16 %v479
    %v1194 = vunpack.c.h.b16 %v479
    %v1195 = vunpack.c.l.b16 %v480
    %v1196 = vunpack.c.h.b16 %v480
    %v1197 = vunpack.c.l.b16 %v481
    %v1198 = vunpack.c.h.b16 %v481
    %v1199 = vunpack.c.l.b16 %v482
    %v1200 = vunpack.c.h.b16 %v482
    %v1201 = vunpack.c.l.b16 %v483
    %v1202 = vunpack.c.h.b16 %v483
    %v1203 = vunpack.c.l.b16 %v484
    %v1204 = vunpack.c.h.b16 %v484
    %v1205 = vunpack.c.l.b16 %v485
    %v1206 = vunpack.c.h.b16 %v485
    %v1207 = vunpack.c.l.b16 %v486
    %v1208 = vunpack.c.h.b16 %v486
    %v1209 = vunpack.c.l.b16 %v487
    %v1210 = vunpack.c.h.b16 %v487
    %v1211 = vunpack.c.l.b16 %v488
    %v1212 = vunpack.c.h.b16 %v488
    %v1213 = vunpack.c.l.b16 %v489
    %v1214 = vunpack.c.h.b16 %v489
    %v1215 = vunpack.c.l.b16 %v490
    %v1216 = vunpack.c.h.b16 %v490
    %v1217 = vunpack.c.l.b16 %v491
    %v1218 = vunpack.c.h.b16 %v491
    %v1219 = vunpack.c.l.b16 %v492
    %v1220 = vunpack.c.h.b16 %v492
    %v1221 = vunpack.c.l.b16 %v493
    %v1222 = vunpack.c.h.b16 %v493
    %v1223 = vunpack.c.l.b16 %v494
    %v1224 = vunpack.c.h.b16 %v494
    %v1225 = vunpack.c.l.b16 %v495
    %v1226 = vunpack.c.h.b16 %v495
    %v1227 = vunpack.c.l.b16 %v496
    %v1228 = vunpack.c.h.b16 %v496
    %v1229 = vunpack.c.l.b16 %v497
    %v1230 = vunpack.c.h.b16 %v497
    %v1231 = vunpack.c.l.b16 %v498
    %v1232 = vunpack.c.h.b16 %v498
    %v1233 = vunpack.c.l.b16 %v499
    %v1234 = vunpack.c.h.b16 %v499
    %v1235 = vunpack.c.l.b16 %v500
    %v1236 = vunpack.c.h.b16 %v500
    %v1237 = vunpack.c.l.b16 %v501
    %v1238 = vunpack.c.h.b16 %v501
    %v1239 = vunpack.c.l.b16 %v502
    %v1240 = vunpack.c.h.b16 %v502
    %v1241 = vunpack.c.l.b16 %v503
    %v1242 = vunpack.c.h.b16 %v503
    %v1243 = vunpack.c.l.b16 %v504
    %v1244 = vunpack.c.h.b16 %v504
    %v1245 = vunpack.c.l.b16 %v505
    %v1246 = vunpack.c.h.b16 %v505
    %v1247 = vunpack.c.l.b16 %v506
    %v1248 = vunpack.c.h.b16 %v506
    %v1249 = vunpack.c.l.b16 %v507
    %v1250 = vunpack.c.h.b16 %v507
    %v1251 = vunpack.c.l.b16 %v508
    %v1252 = vunpack.c.h.b16 %v508
    %v1253 = vunpack.c.l.b16 %v509
    %v1254 = vunpack.c.h.b16 %v509
    %v1255 = vunpack.c.l.b16 %v510
    %v1256 = vunpack.c.h.b16 %v510
    %v1257 = vunpack.c.l.b16 %v511
    %v1258 = vunpack.c.h.b16 %v511
    %v1259 = vunpack.c.l.b16 %v512
    %v1260 = vunpack.c.h.b16 %v512
    %v1261 = vunpack.c.l.b16 %v513
    %v1262 = vunpack.c.h.b16 %v513
    %v1263 = vunpack.c.l.b16 %v514
    %v1264 = vunpack.c.h.b16 %v514
    %v1265 = vunpack.c.l.b16 %v515
    %v1266 = vunpack.c.h.b16 %v515
    %v1267 = vunpack.c.l.b16 %v516
    %v1268 = vunpack.c.h.b16 %v516
    %v1269 = vunpack.c.l.b16 %v517
    %v1270 = vunpack.c.h.b16 %v517
    %v1271 = vunpack.c.l.b16 %v518
    %v1272 = vunpack.c.h.b16 %v518
    %v1273 = vunpack.c.l.b16 %v519
    %v1274 = vunpack.c.h.b16 %v519
    %v1275 = vunpack.c.l.b16 %v520
    %v1276 = vunpack.c.h.b16 %v520
    %v1277 = vunpack.c.l.b16 %v521
    %v1278 = vunpack.c.h.b16 %v521
    %v1279 = vunpack.c.l.b16 %v522
    %v1280 = vunpack.c.h.b16 %v522
    %v1281 = vunpack.c.l.b16 %v523
    %v1282 = vunpack.c.h.b16 %v523
    %v1283 = vunpack.c.l.b16 %v524
    %v1284 = vunpack.c.h.b16 %v524
    %v1285 = vunpack.c.l.b16 %v525
    %v1286 = vunpack.c.h.b16 %v525
    %v1287 = vunpack.c.l.b16 %v526
    %v1288 = vunpack.c.h.b16 %v526
    %v1289 = vunpack.c.l.b16 %v527
    %v1290 = vunpack.c.h.b16 %v527
    %v1291 = vunpack.c.l.b16 %v528
    %v1292 = vunpack.c.h.b16 %v528
    %v1293 = vunpack.c.l.b16 %v529
    %v1294 = vunpack.c.h.b16 %v529
    %v1295 = vunpack.c.l.b16 %v530
    %v1296 = vunpack.c.h.b16 %v530
    %v1297 = vunpack.c.l.b16 %v531
    %v1298 = vunpack.c.h.b16 %v531
    %v1299 = vunpack.c.l.b16 %v532
    %v1300 = vunpack.c.h.b16 %v532
    %v1301 = vunpack.c.l.b16 %v533
    %v1302 = vunpack.c.h.b16 %v533
    %v1303 = vunpack.c.l.b16 %v534
    %v1304 = vunpack.c.h.b16 %v534
    %v1305 = vunpack.c.l.b16 %v535
    %v1306 = vunpack.c.h.b16 %v535
    %v1307 = vunpack.c.l.b16 %v536
    %v1308 = vunpack.c.h.b16 %v536
    %v1309 = vunpack.c.l.b16 %v537
    %v1310 = vunpack.c.h.b16 %v537
    %v1311 = vunpack.c.l.b16 %v538
    %v1312 = vunpack.c.h.b16 %v538
    %v1313 = vunpack.c.l.b16 %v539
    %v1314 = vunpack.c.h.b16 %v539
    %v1315 = vunpack.c.l.b16 %v540
    %v1316 = vunpack.c.h.b16 %v540
    %v1317 = vunpack.c.l.b16 %v541
    %v1318 = vunpack.c.h.b16 %v541
    %v1319 = vunpack.c.l.b16 %v542
    %v1320 = vunpack.c.h.b16 %v542
    %v1321 = vunpack.c.l.b16 %v543
    %v1322 = vunpack.c.h.b16 %v543
    %v1323 = vunpack.c.l.b16 %v544
    %v1324 = vunpack.c.h.b16 %v544
    %v1325 = vunpack.c.l.b16 %v545
    %v1326 = vunpack.c.h.b16 %v545
    %v1327 = vunpack.c.l.b16 %v546
    %v1328 = vunpack.c.h.b16 %v546
    %v1329 = vunpack.c.l.b16 %v547
    %v1330 = vunpack.c.h.b16 %v547
    %v1331 = vunpack.c.l.b16 %v548
    %v1332 = vunpack.c.h.b16 %v548
    %v1333 = vunpack.c.l.b16 %v549
    %v1334 = vunpack.c.h.b16 %v549
    %v1335 = vunpack.c.l.b16 %v550
    %v1336 = vunpack.c.h.b16 %v550
    %v1337 = vunpack.c.l.b16 %v551
    %v1338 = vunpack.c.h.b16 %v551
    %v1339 = vunpack.c.l.b16 %v552
    %v1340 = vunpack.c.h.b16 %v552
    %v1341 = vunpack.c.l.b16 %v553
    %v1342 = vunpack.c.h.b16 %v553
    %v1343 = vunpack.c.l.b16 %v554
    %v1344 = vunpack.c.h.b16 %v554
    %v1345 = vunpack.c.l.b16 %v555
    %v1346 = vunpack.c.h.b16 %v555
    %v1347 = vunpack.c.l.b16 %v556
    %v1348 = vunpack.c.h.b16 %v556
    %v1349 = vunpack.c.l.b16 %v557
    %v1350 = vunpack.c.h.b16 %v557
    %v1351 = vunpack.c.l.b16 %v558
    %v1352 = vunpack.c.h.b16 %v558
    %v1353 = vunpack.c.l.b16 %v559
    %v1354 = vunpack.c.h.b16 %v559
    %v1355 = vunpack.c.l.b16 %v560
    %v1356 = vunpack.c.h.b16 %v560
    %v1357 = vunpack.c.l.b16 %v561
    %v1358 = vunpack.c.h.b16 %v561
    %v1359 = vunpack.c.l.b16 %v562
    %v1360 = vunpack.c.h.b16 %v562
    %v1361 = vunpack.c.l.b16 %v563
    %v1362 = vunpack.c.h.b16 %v563
    %v1363 = vunpack.c.l.b16 %v564
    %v1364 = vunpack.c.h.b16 %v564
    %v1365 = vunpack.c.l.b16 %v565
    %v1366 = vunpack.c.h.b16 %v565
    %v1367 = vunpack.c.l.b16 %v566
    %v1368 = vunpack.c.h.b16 %v566
    %v1369 = vunpack.c.l.b16 %v567
    %v1370 = vunpack.c.h.b16 %v567
    %v1371 = vunpack.c.l.b16 %v568
    %v1372 = vunpack.c.h.b16 %v568
    %v1373 = vunpack.c.l.b16 %v569
    %v1374 = vunpack.c.h.b16 %v569
    %v1375 = vunpack.c.l.b16 %v570
    %v1376 = vunpack.c.h.b16 %v570
    %v1377 = vunpack.c.l.b16 %v571
    %v1378 = vunpack.c.h.b16 %v571
    %v1379 = vunpack.c.l.b16 %v572
    %v1380 = vunpack.c.h.b16 %v572
    %v1381 = vunpack.c.l.b16 %v573
    %v1382 = vunpack.c.h.b16 %v573
    %v1383 = vunpack.c.l.b16 %v574
    %v1384 = vunpack.c.h.b16 %v574
    %v1385 = vunpack.c.l.b16 %v575
    %v1386 = vunpack.c.h.b16 %v575
    %v1387 = vunpack.c.l.b16 %v576
    %v1388 = vunpack.c.h.b16 %v576
    %v1389 = vunpack.c.l.b16 %v577
    %v1390 = vunpack.c.h.b16 %v577
    %v1391 = vunpack.c.l.b16 %v578
    %v1392 = vunpack.c.h.b16 %v578
    %v1393 = vunpack.c.l.b16 %v579
    %v1394 = vunpack.c.h.b16 %v579
    %v1395 = vunpack.c.l.b16 %v580
    %v1396 = vunpack.c.h.b16 %v580
    %v1397 = vunpack.c.l.b16 %v581
    %v1398 = vunpack.c.h.b16 %v581
    %v1399 = vunpack.c.l.b16 %v582
    %v1400 = vunpack.c.h.b16 %v582
    %v1401 = vunpack.c.l.b16 %v583
    %v1402 = vunpack.c.h.b16 %v583
    %v1403 = vunpack.c.l.b16 %v584
    %v1404 = vunpack.c.h.b16 %v584
    %v1405 = vunpack.c.l.b16 %v585
    %v1406 = vunpack.c.h.b16 %v585
    %v1407 = vunpack.c.l.b16 %v586
    %v1408 = vunpack.c.h.b16 %v586
    %v1409 = vunpack.c.l.b16 %v587
    %v1410 = vunpack.c.h.b16 %v587
    %v1411 = vunpack.c.l.b16 %v588
    %v1412 = vunpack.c.h.b16 %v588
    %v1413 = vunpack.c.l.b16 %v589
    %v1414 = vunpack.c.h.b16 %v589
    %v1415 = vunpack.c.l.b16 %v590
    %v1416 = vunpack.c.h.b16 %v590
    %v1417 = vunpack.c.l.b16 %v591
    %v1418 = vunpack.c.h.b16 %v591
    %v1419 = vunpack.c.l.b16 %v592
    %v1420 = vunpack.c.h.b16 %v592
    %v1421 = vunpack.c.l.b16 %v593
    %v1422 = vunpack.c.h.b16 %v593
    %v1423 = vunpack.c.l.b16 %v594
    %v1424 = vunpack.c.h.b16 %v594
    %v1425 = vunpack.c.l.b16 %v595
    %v1426 = vunpack.c.h.b16 %v595
    %v1427 = vunpack.c.l.b16 %v596
    %v1428 = vunpack.c.h.b16 %v596
    %v1429 = vunpack.c.l.b16 %v597
    %v1430 = vunpack.c.h.b16 %v597
    %v1431 = vunpack.c.l.b16 %v598
    %v1432 = vunpack.c.h.b16 %v598
    %v1433 = vunpack.c.l.b16 %v599
    %v1434 = vunpack.c.h.b16 %v599
    %v1435 = vunpack.c.l.b16 %v600
    %v1436 = vunpack.c.h.b16 %v600
    %v1437 = vunpack.c.l.b16 %v601
    %v1438 = vunpack.c.h.b16 %v601
    %v1439 = vunpack.c.l.b16 %v602
    %v1440 = vunpack.c.h.b16 %v602
    %v1441 = vunpack.c.l.b16 %v603
    %v1442 = vunpack.c.h.b16 %v603
    %v1443 = vunpack.c.l.b16 %v604
    %v1444 = vunpack.c.h.b16 %v604
    %v1445 = vunpack.c.l.b16 %v605
    %v1446 = vunpack.c.h.b16 %v605
    %v1447 = vunpack.c.l.b16 %v606
    %v1448 = vunpack.c.h.b16 %v606
    %v1449 = vunpack.c.l.b16 %v607
    %v1450 = vunpack.c.h.b16 %v607
    %v1451 = vunpack.c.l.b16 %v608
    %v1452 = vunpack.c.h.b16 %v608
    %v1453 = vunpack.c.l.b16 %v609
    %v1454 = vunpack.c.h.b16 %v609
    %v1455 = vunpack.c.l.b16 %v610
    %v1456 = vunpack.c.h.b16 %v610
    %v1457 = vunpack.c.l.b16 %v611
    %v1458 = vunpack.c.h.b16 %v611
    %v1459 = vunpack.c.l.b16 %v612
    %v1460 = vunpack.c.h.b16 %v612
    %v1461 = vunpack.c.l.b16 %v613
    %v1462 = vunpack.c.h.b16 %v613
    %v1463 = vunpack.c.l.b16 %v614
    %v1464 = vunpack.c.h.b16 %v614
    %v1465 = vunpack.c.l.b16 %v615
    %v1466 = vunpack.c.h.b16 %v615
    %v1467 = vunpack.c.l.b16 %v616
    %v1468 = vunpack.c.h.b16 %v616
    %v1469 = vunpack.c.l.b16 %v617
    %v1470 = vunpack.c.h.b16 %v617
    %v1471 = vunpack.c.l.b16 %v618
    %v1472 = vunpack.c.h.b16 %v618
    %v1473 = vunpack.c.l.b16 %v619
    %v1474 = vunpack.c.h.b16 %v619
    %v1475 = vunpack.c.l.b16 %v620
    %v1476 = vunpack.c.h.b16 %v620
    %v1477 = vunpack.c.l.b16 %v621
    %v1478 = vunpack.c.h.b16 %v621
    %v1479 = vunpack.c.l.b16 %v622
    %v1480 = vunpack.c.h.b16 %v622
    %v1481 = vunpack.c.l.b16 %v623
    %v1482 = vunpack.c.h.b16 %v623
    %v1483 = vunpack.c.l.b16 %v624
    %v1484 = vunpack.c.h.b16 %v624
    %v1485 = vunpack.c.l.b16 %v625
    %v1486 = vunpack.c.h.b16 %v625
    %v1487 = vunpack.c.l.b16 %v626
    %v1488 = vunpack.c.h.b16 %v626
    %v1489 = vunpack.c.l.b16 %v627
    %v1490 = vunpack.c.h.b16 %v627
    %v1491 = vunpack.c.l.b16 %v628
    %v1492 = vunpack.c.h.b16 %v628
    %v1493 = vunpack.c.l.b16 %v629
    %v1494 = vunpack.c.h.b16 %v629
    %v1495 = vunpack.c.l.b16 %v630
    %v1496 = vunpack.c.h.b16 %v630
    %v1497 = vunpack.c.l.b16 %v631
    %v1498 = vunpack.c.h.b16 %v631
    %v1499 = vunpack.c.l.b16 %v632
    %v1500 = vunpack.c.h.b16 %v632
    %v1501 = vunpack.c.l.b16 %v633
    %v1502 = vunpack.c.h.b16 %v633
    %v1503 = vunpack.c.l.b16 %v634
    %v1504 = vunpack.c.h.b16 %v634
    %v1505 = vunpack.c.l.b16 %v635
    %v1506 = vunpack.c.h.b16 %v635
    %v1507 = vunpack.c.l.b16 %v636
    %v1508 = vunpack.c.h.b16 %v636
    %v1509 = vunpack.c.l.b16 %v637
    %v1510 = vunpack.c.h.b16 %v637
    %v1511 = vunpack.c.l.b16 %v638
    %v1512 = vunpack.c.h.b16 %v638
    %v1513 = vunpack.c.l.b16 %v639
    %v1514 = vunpack.c.h.b16 %v639
    %v1515 = vunpack.c.l.b16 %v640
    %v1516 = vunpack.c.h.b16 %v640
    %v1517 = vunpack.c.l.b16 %v641
    %v1518 = vunpack.c.h.b16 %v641
    %v1519 = vunpack.c.l.b16 %v642
    %v1520 = vunpack.c.h.b16 %v642
    %v1521 = vunpack.c.l.b16 %v643
    %v1522 = vunpack.c.h.b16 %v643
    %v1523 = vunpack.c.l.b16 %v644
    %v1524 = vunpack.c.h.b16 %v644
    %v1525 = vunpack.c.l.b16 %v645
    %v1526 = vunpack.c.h.b16 %v645
    %v1527 = vunpack.c.l.b16 %v646
    %v1528 = vunpack.c.h.b16 %v646
    %v1529 = vunpack.c.l.b16 %v647
    %v1530 = vunpack.c.h.b16 %v647
    %v1531 = vunpack.c.l.b16 %v648
    %v1532 = vunpack.c.h.b16 %v648
    %v1533 = vunpack.c.l.b16 %v649
    %v1534 = vunpack.c.h.b16 %v649
    %v1535 = vunpack.c.l.b16 %v650
    %v1536 = vunpack.c.h.b16 %v650
    %v1537 = vunpack.c.l.b16 %v651
    %v1538 = vunpack.c.h.b16 %v651
    %v1539 = vunpack.c.l.b16 %v652
    %v1540 = vunpack.c.h.b16 %v652
    %v1541 = vunpack.c.l.b16 %v653
    %v1542 = vunpack.c.h.b16 %v653
    %v1543 = vunpack.c.l.b16 %v654
    %v1544 = vunpack.c.h.b16 %v654
    %v1545 = vunpack.c.l.b16 %v655
    %v1546 = vunpack.c.h.b16 %v655
    %v1547 = vunpack.c.l.b16 %v656
    %v1548 = vunpack.c.h.b16 %v656
    %v1549 = vunpack.c.l.b16 %v657
    %v1550 = vunpack.c.h.b16 %v657
    %v1551 = vunpack.c.l.b16 %v658
    %v1552 = vunpack.c.h.b16 %v658
    %v1553 = vpack.c.b16 %v967, %v965
    %v1554 = vpack.c.b16 %v968, %v966
    %v1555 = vpack.c.b16 %v971, %v969
    %v1556 = vpack.c.b16 %v972, %v970
    %v1557 = vpack.c.b16 %v975, %v973
    %v1558 = vpack.c.b16 %v976, %v974
    %v1559 = vpack.c.b16 %v979, %v977
    %v1560 = vpack.c.b16 %v980, %v978
    %v1561 = vpack.c.b16 %v983, %v981
    %v1562 = vpack.c.b16 %v984, %v982
    %v1563 = vpack.c.b16 %v987, %v985
    %v1564 = vpack.c.b16 %v988, %v986
    %v1565 = vpack.c.b16 %v991, %v989
    %v1566 = vpack.c.b16 %v992, %v990
    %v1567 = vpack.c.b16 %v995, %v993
    %v1568 = vpack.c.b16 %v996, %v994
    %v1569 = vpack.c.b16 %v999, %v997
    %v1570 = vpack.c.b16 %v1000, %v998
    %v1571 = vpack.c.b16 %v1003, %v1001
    %v1572 = vpack.c.b16 %v1004, %v1002
    %v1573 = vpack.c.b16 %v1007, %v1005
    %v1574 = vpack.c.b16 %v1008, %v1006
    %v1575 = vpack.c.b16 %v1011, %v1009
    %v1576 = vpack.c.b16 %v1012, %v1010
    %v1577 = vpack.c.b16 %v1015, %v1013
    %v1578 = vpack.c.b16 %v1016, %v1014
    %v1579 = vpack.c.b16 %v1019, %v1017
    %v1580 = vpack.c.b16 %v1020, %v1018
    %v1581 = vpack.c.b16 %v1023, %v1021
    %v1582 = vpack.c.b16 %v1024, %v1022
    %v1583 = vpack.c.b16 %v1027, %v1025
    %v1584 = vpack.c.b16 %v1028, %v1026
    %v1585 = vpack.c.b16 %v1031, %v1029
    %v1586 = vpack.c.b16 %v1032, %v1030
    %v1587 = vpack.c.b16 %v1035, %v1033
    %v1588 = vpack.c.b16 %v1036, %v1034
    %v1589 = vpack.c.b16 %v1039, %v1037
    %v1590 = vpack.c.b16 %v1040, %v1038
    %v1591 = vpack.c.b16 %v1043, %v1041
    %v1592 = vpack.c.b16 %v1044, %v1042
    %v1593 = vpack.c.b16 %v1047, %v1045
    %v1594 = vpack.c.b16 %v1048, %v1046
    %v1595 = vpack.c.b16 %v1051, %v1049
    %v1596 = vpack.c.b16 %v1052, %v1050
    %v1597 = vpack.c.b16 %v1055, %v1053
    %v1598 = vpack.c.b16 %v1056, %v1054
    %v1599 = vpack.c.b16 %v1059, %v1057
    %v1600 = vpack.c.b16 %v1060, %v1058
    %v1601 = vpack.c.b16 %v1063, %v1061
    %v1602 = vpack.c.b16 %v1064, %v1062
    %v1603 = vpack.c.b16 %v1067, %v1065
    %v1604 = vpack.c.b16 %v1068, %v1066
    %v1605 = vpack.c.b16 %v1071, %v1069
    %v1606 = vpack.c.b16 %v1072, %v1070
    %v1607 = vpack.c.b16 %v1075, %v1073
    %v1608 = vpack.c.b16 %v1076, %v1074
    %v1609 = vpack.c.b16 %v1079, %v1077
    %v1610 = vpack.c.b16 %v1080, %v1078
    %v1611 = vpack.c.b16 %v1083, %v1081
    %v1612 = vpack.c.b16 %v1084, %v1082
    %v1613 = vpack.c.b16 %v1087, %v1085
    %v1614 = vpack.c.b16 %v1088, %v1086
    %v1615 = vpack.c.b16 %v1091, %v1089
    %v1616 = vpack.c.b16 %v1092, %v1090
    %v1617 = vpack.c.b16 %v1095, %v1093
    %v1618 = vpack.c.b16 %v1096, %v1094
    %v1619 = vpack.c.b16 %v1099, %v1097
    %v1620 = vpack.c.b16 %v1100, %v1098
    %v1621 = vpack.c.b16 %v1103, %v1101
    %v1622 = vpack.c.b16 %v1104, %v1102
    %v1623 = vpack.c.b16 %v1107, %v1105
    %v1624 = vpack.c.b16 %v1108, %v1106
    %v1625 = vpack.c.b16 %v1111, %v1109
    %v1626 = vpack.c.b16 %v1112, %v1110
    %v1627 = vpack.c.b16 %v1115, %v1113
    %v1628 = vpack.c.b16 %v1116, %v1114
    %v1629 = vpack.c.b16 %v1119, %v1117
    %v1630 = vpack.c.b16 %v1120, %v1118
    %v1631 = vpack.c.b16 %v1123, %v1121
    %v1632 = vpack.c.b16 %v1124, %v1122
    %v1633 = vpack.c.b16 %v1127, %v1125
    %v1634 = vpack.c.b16 %v1128, %v1126
    %v1635 = vpack.c.b16 %v1131, %v1129
    %v1636 = vpack.c.b16 %v1132, %v1130
    %v1637 = vpack.c.b16 %v1135, %v1133
    %v1638 = vpack.c.b16 %v1136, %v1134
    %v1639 = vpack.c.b16 %v1139, %v1137
    %v1640 = vpack.c.b16 %v1140, %v1138
    %v1641 = vpack.c.b16 %v1143, %v1141
    %v1642 = vpack.c.b16 %v1144, %v1142
    %v1643 = vpack.c.b16 %v1147, %v1145
    %v1644 = vpack.c.b16 %v1148, %v1146
    %v1645 = vpack.c.b16 %v1151, %v1149
    %v1646 = vpack.c.b16 %v1152, %v1150
    %v1647 = vpack.c.b16 %v1155, %v1153
    %v1648 = vpack.c.b16 %v1156, %v1154
    %v1649 = vpack.c.b16 %v1159, %v1157
    %v1650 = vpack.c.b16 %v1160, %v1158
    %v1651 = vpack.c.b16 %v1163, %v1161
    %v1652 = vpack.c.b16 %v1164, %v1162
    %v1653 = vpack.c.b16 %v1167, %v1165
    %v1654 = vpack.c.b16 %v1168, %v1166
    %v1655 = vpack.c.b16 %v1171, %v1169
    %v1656 = vpack.c.b16 %v1172, %v1170
    %v1657 = vpack.c.b16 %v1175, %v1173
    %v1658 = vpack.c.b16 %v1176, %v1174
    %v1659 = vpack.c.b16 %v1179, %v1177
    %v1660 = vpack.c.b16 %v1180, %v1178
    %v1661 = vpack.c.b16 %v1183, %v1181
    %v1662 = vpack.c.b16 %v1184, %v1182
    %v1663 = vpack.c.b16 %v1187, %v1185
    %v1664 = vpack.c.b16 %v1188, %v1186
    %v1665 = vpack.c.b16 %v1191, %v1189
    %v1666 = vpack.c.b16 %v1192, %v1190
    %v1667 = vpack.c.b16 %v1195, %v1193
    %v1668 = vpack.c.b16 %v1196, %v1194
    %v1669 = vpack.c.b16 %v1199, %v1197
    %v1670 = vpack.c.b16 %v1200, %v1198
    %v1671 = vpack.c.b16 %v1203, %v1201
    %v1672 = vpack.c.b16 %v1204, %v1202
    %v1673 = vpack.c.b16 %v1207, %v1205
    %v1674 = vpack.c.b16 %v1208, %v1206
    %v1675 = vpack.c.b16 %v1211, %v1209
    %v1676 = vpack.c.b16 %v1212, %v1210
    %v1677 = vpack.c.b16 %v1215, %v1213
    %v1678 = vpack.c.b16 %v1216, %v1214
    %v1679 = vpack.c.b16 %v1219, %v1217
    %v1680 = vpack.c.b16 %v1220, %v1218
    %v1681 = vpack.c.b16 %v1223, %v1221
    %v1682 = vpack.c.b16 %v1224, %v1222
    %v1683 = vpack.c.b16 %v1227, %v1225
    %v1684 = vpack.c.b16 %v1228, %v1226
    %v1685 = vpack.c.b16 %v1231, %v1229
    %v1686 = vpack.c.b16 %v1232, %v1230
    %v1687 = vpack.c.b16 %v1235, %v1233
    %v1688 = vpack.c.b16 %v1236, %v1234
    %v1689 = vpack.c.b16 %v1239, %v1237
    %v1690 = vpack.c.b16 %v1240, %v1238
    %v1691 = vpack.c.b16 %v1243, %v1241
    %v1692 = vpack.c.b16 %v1244, %v1242
    %v1693 = vpack.c.b16 %v1247, %v1245
    %v1694 = vpack.c.b16 %v1248, %v1246
    %v1695 = vpack.c.b16 %v1251, %v1249
    %v1696 = vpack.c.b16 %v1252, %v1250
    %v1697 = vpack.c.b16 %v1255, %v1253
    %v1698 = vpack.c.b16 %v1256, %v1254
    %v1699 = vpack.c.b16 %v1259, %v1257
    %v1700 = vpack.c.b16 %v1260, %v1258
    %v1701 = vpack.c.b16 %v1263, %v1261
    %v1702 = vpack.c.b16 %v1264, %v1262
    %v1703 = vpack.c.b16 %v1267, %v1265
    %v1704 = vpack.c.b16 %v1268, %v1266
    %v1705 = vpack.c.b16 %v1271, %v1269
    %v1706 = vpack.c.b16 %v1272, %v1270
    %v1707 = vpack.c.b16 %v1275, %v1273
    %v1708 = vpack.c.b16 %v1276, %v1274
    %v1709 = vpack.c.b16 %v1279, %v1277
    %v1710 = vpack.c.b16 %v1280, %v1278
    %v1711 = vpack.c.b16 %v1283, %v1281
    %v1712 = vpack.c.b16 %v1284, %v1282
    %v1713 = vpack.c.b16 %v1287, %v1285
    %v1714 = vpack.c.b16 %v1288, %v1286
    %v1715 = vpack.c.b16 %v1291, %v1289
    %v1716 = vpack.c.b16 %v1292, %v1290
    %v1717 = vpack.c.b16 %v1295, %v1293
    %v1718 = vpack.c.b16 %v1296, %v1294
    %v1719 = vpack.c.b16 %v1299, %v1297
    %v1720 = vpack.c.b16 %v1300, %v1298
    %v1721 = vpack.c.b16 %v1303, %v1301
    %v1722 = vpack.c.b16 %v1304, %v1302
    %v1723 = vpack.c.b16 %v1307, %v1305
    %v1724 = vpack.c.b16 %v1308, %v1306
    %v1725 = vpack.c.b16 %v1311, %v1309
    %v1726 = vpack.c.b16 %v1312, %v1310
    %v1727 = vpack.c.b16 %v1315, %v1313
    %v1728 = vpack.c.b16 %v1316, %v1314
    %v1729 = vpack.c.b16 %v1319, %v1317
    %v1730 = vpack.c.b16 %v1320, %v1318
    %v1731 = vpack.c.b16 %v1323, %v1321
    %v1732 = vpack.c.b16 %v1324, %v1322
    %v1733 = vpack.c.b16 %v1327, %v1325
    %v1734 = vpack.c.b16 %v1328, %v1326
    %v1735 = vpack.c.b16 %v1331, %v1329
    %v1736 = vpack.c.b16 %v1332, %v1330
    %v1737 = vpack.c.b16 %v1335, %v1333
    %v1738 = vpack.c.b16 %v1336, %v1334
    %v1739 = vpack.c.b16 %v1339, %v1337
    %v1740 = vpack.c.b16 %v1340, %v1338
    %v1741 = vpack.c.b16 %v1343, %v1341
    %v1742 = vpack.c.b16 %v1344, %v1342
    %v1743 = vpack.c.b16 %v1347, %v1345
    %v1744 = vpack.c.b16 %v1348, %v1346
    %v1745 = vpack.c.b16 %v1351, %v1349
    %v1746 = vpack.c.b16 %v1352, %v1350
    %v1747 = vpack.c.b16 %v1355, %v1353
    %v1748 = vpack.c.b16 %v1356, %v1354
    %v1749 = vpack.c.b16 %v1359, %v1357
    %v1750 = vpack.c.b16 %v1360, %v1358
    %v1751 = vpack.c.b16 %v1363, %v1361
    %v1752 = vpack.c.b16 %v1364, %v1362
    %v1753 = vpack.c.b16 %v1367, %v1365
    %v1754 = vpack.c.b16 %v1368, %v1366
    %v1755 = vpack.c.b16 %v1371, %v1369
    %v1756 = vpack.c.b16 %v1372, %v1370
    %v1757 = vpack.c.b16 %v1375, %v1373
    %v1758 = vpack.c.b16 %v1376, %v1374
    %v1759 = vpack.c.b16 %v1379, %v1377
    %v1760 = vpack.c.b16 %v1380, %v1378
    %v1761 = vpack.c.b16 %v1383, %v1381
    %v1762 = vpack.c.b16 %v1384, %v1382
    %v1763 = vpack.c.b16 %v1387, %v1385
    %v1764 = vpack.c.b16 %v1388, %v1386
    %v1765 = vpack.c.b16 %v1391, %v1389
    %v1766 = vpack.c.b16 %v1392, %v1390
    %v1767 = vpack.c.b16 %v1395, %v1393
    %v1768 = vpack.c.b16 %v1396, %v1394
    %v1769 = vpack.c.b16 %v1399, %v1397
    %v1770 = vpack.c.b16 %v1400, %v1398
    %v1771 = vpack.c.b16 %v1403, %v1401
    %v1772 = vpack.c.b16 %v1404, %v1402
    %v1773 = vpack.c.b16 %v1407, %v1405
    %v1774 = vpack.c.b16 %v1408, %v1406
    %v1775 = vpack.c.b16 %v1411, %v1409
    %v1776 = vpack.c.b16 %v1412, %v1410
    %v1777 = vpack.c.b16 %v1415, %v1413
    %v1778 = vpack.c.b16 %v1416, %v1414
    %v1779 = vpack.c.b16 %v1419, %v1417
    %v1780 = vpack.c.b16 %v1420, %v1418
    %v1781 = vpack.c.b16 %v1423, %v1421
    %v1782 = vpack.c.b16 %v1424, %v1422
    %v1783 = vpack.c.b16 %v1427, %v1425
    %v1784 = vpack.c.b16 %v1428, %v1426
    %v1785 = vpack.c.b16 %v1431, %v1429
    %v1786 = vpack.c.b16 %v1432, %v1430
    %v1787 = vpack.c.b16 %v1435, %v1433
    %v1788 = vpack.c.b16 %v1436, %v1434
    %v1789 = vpack.c.b16 %v1439, %v1437
    %v1790 = vpack.c.b16 %v1440, %v1438
    %v1791 = vpack.c.b16 %v1443, %v1441
    %v1792 = vpack.c.b16 %v1444, %v1442
    %v1793 = vpack.c.b16 %v1447, %v1445
    %v1794 = vpack.c.b16 %v1448, %v1446
    %v1795 = vpack.c.b16 %v1451, %v1449
    %v1796 = vpack.c.b16 %v1452, %v1450
    %v1797 = vpack.c.b16 %v1455, %v1453
    %v1798 = vpack.c.b16 %v1456, %v1454
    %v1799 = vpack.c.b16 %v1459, %v1457
    %v1800 = vpack.c.b16 %v1460, %v1458
    %v1801 = vpack.c.b16 %v1463, %v1461
    %v1802 = vpack.c.b16 %v1464, %v1462
    %v1803 = vpack.c.b16 %v1467, %v1465
    %v1804 = vpack.c.b16 %v1468, %v1466
    %v1805 = vpack.c.b16 %v1471, %v1469
    %v1806 = vpack.c.b16 %v1472, %v1470
    %v1807 = vpack.c.b16 %v1475, %v1473
    %v1808 = vpack.c.b16 %v1476, %v1474
    %v1809 = vpack.c.b16 %v1479, %v1477
    %v1810 = vpack.c.b16 %v1480, %v1478
    %v1811 = vpack.c.b16 %v1483, %v1481
    %v1812 = vpack.c.b16 %v1484, %v1482
    %v1813 = vpack.c.b16 %v1487, %v1485
    %v1814 = vpack.c.b16 %v1488, %v1486
    %v1815 = vpack.c.b16 %v1491, %v1489
    %v1816 = vpack.c.b16 %v1492, %v1490
    %v1817 = vpack.c.b16 %v1495, %v1493
    %v1818 = vpack.c.b16 %v1496, %v1494
    %v1819 = vpack.c.b16 %v1499, %v1497
    %v1820 = vpack.c.b16 %v1500, %v1498
    %v1821 = vpack.c.b16 %v1503, %v1501
    %v1822 = vpack.c.b16 %v1504, %v1502
    %v1823 = vpack.c.b16 %v1507, %v1505
    %v1824 = vpack.c.b16 %v1508, %v1506
    %v1825 = vpack.c.b16 %v1511, %v1509
    %v1826 = vpack.c.b16 %v1512, %v1510
    %v1827 = vpack.c.b16 %v1515, %v1513
    %v1828 = vpack.c.b16 %v1516, %v1514
    %v1829 = vpack.c.b16 %v1519, %v1517
    %v1830 = vpack.c.b16 %v1520, %v1518
    %v1831 = vpack.c.b16 %v1523, %v1521
    %v1832 = vpack.c.b16 %v1524, %v1522
    %v1833 = vpack.c.b16 %v1527, %v1525
    %v1834 = vpack.c.b16 %v1528, %v1526
    %v1835 = vpack.c.b16 %v1531, %v1529
    %v1836 = vpack.c.b16 %v1532, %v1530
    %v1837 = vpack.c.b16 %v1535, %v1533
    %v1838 = vpack.c.b16 %v1536, %v1534
    %v1839 = vpack.c.b16 %v1539, %v1537
    %v1840 = vpack.c.b16 %v1540, %v1538
    %v1841 = vpack.c.b16 %v1543, %v1541
    %v1842 = vpack.c.b16 %v1544, %v1542
    %v1843 = vpack.c.b16 %v1547, %v1545
    %v1844 = vpack.c.b16 %v1548, %v1546
    %v1845 = vpack.c.b16 %v1551, %v1549
    %v1846 = vpack.c.b16 %v1552, %v1550
    %vm2141 = vcmask 392192
    %v2143 = vsel %vm2141, %v364, 0
    %2145 = vmatprep.subr.bf16.mxu0 %v1568
    %2146 = vmatpush1.bf16.msra.mxu0 %v1567
    %2147 = vmatprep.subr.bf16.mxu0 %v1566
    %2148 = vmatpush1.bf16.msra.mxu0 %v1565
    %2149 = vmatprep.subr.bf16.mxu0 %v1564
    %2150 = vmatpush1.bf16.msra.mxu0 %v1563
    %2151 = vmatprep.subr.bf16.mxu0 %v1562
    %2152 = vmatpush1.bf16.msra.mxu0 %v1561
    %2153 = vmatprep.subr.bf16.mxu0 %v1560
    %2154 = vmatpush1.bf16.msra.mxu0 %v1559
    %2155 = vmatprep.subr.bf16.mxu0 %v1558
    %2156 = vmatpush1.bf16.msra.mxu0 %v1557
    %2157 = vmatprep.subr.bf16.mxu0 %v1556
    %2158 = vmatpush1.bf16.msra.mxu0 %v1555
    %2159 = vmatprep.subr.bf16.mxu0 %v1554
    %2160 = vmatpush1.bf16.msra.mxu0 %v1553
    %2161 = vmatprep.subr.bf16.mxu0 %v1584
    %2162 = vmatpush2.bf16.msra.mxu0 %v1583
    %2163 = vmatprep.subr.bf16.mxu0 %v1582
    %2164 = vmatpush2.bf16.msra.mxu0 %v1581
    %2165 = vmatprep.subr.bf16.mxu0 %v1580
    %2166 = vmatpush2.bf16.msra.mxu0 %v1579
    %2167 = vmatprep.subr.bf16.mxu0 %v1578
    %2168 = vmatpush2.bf16.msra.mxu0 %v1577
    %2169 = vmatprep.subr.bf16.mxu0 %v1576
    %2170 = vmatpush2.bf16.msra.mxu0 %v1575
    %2171 = vmatprep.subr.bf16.mxu0 %v1574
    %2172 = vmatpush2.bf16.msra.mxu0 %v1573
    %2173 = vmatprep.subr.bf16.mxu0 %v1572
    %2174 = vmatpush2.bf16.msra.mxu0 %v1571
    %2175 = vmatprep.subr.bf16.mxu0 %v1570
    %2176 = vmatpush2.bf16.msra.mxu0 %v1569
    %2177 = vmatprep.mubr.bf16.mxu0 %v347
    %2178 = vmatmul.mubr.bf16.gmra.mxu0 %v346
    %v2179 = vpop.f32.mrf.mxu0
    %v2180 = vadd.f32 %v664, %v2179
    %v2181 = vpop.f32.mrf.mxu0
    %v2182 = vadd.f32 %v668, %v2181
    %v2183 = vpop.f32.mrf.mxu0
    %v2184 = vpop.f32.mrf.mxu0
    %2185 = vdwg.mxu0
    %2186 = vmatprep.subr.bf16.mxu0 %v1600
    %2187 = vmatpush1.bf16.msra.mxu0 %v1599
    %2188 = vmatprep.subr.bf16.mxu0 %v1598
    %2189 = vmatpush1.bf16.msra.mxu0 %v1597
    %2190 = vmatprep.subr.bf16.mxu0 %v1596
    %2191 = vmatpush1.bf16.msra.mxu0 %v1595
    %2192 = vmatprep.subr.bf16.mxu0 %v1594
    %2193 = vmatpush1.bf16.msra.mxu0 %v1593
    %2194 = vmatprep.subr.bf16.mxu0 %v1592
    %2195 = vmatpush1.bf16.msra.mxu0 %v1591
    %2196 = vmatprep.subr.bf16.mxu0 %v1590
    %2197 = vmatpush1.bf16.msra.mxu0 %v1589
    %2198 = vmatprep.subr.bf16.mxu0 %v1588
    %2199 = vmatpush1.bf16.msra.mxu0 %v1587
    %2200 = vmatprep.subr.bf16.mxu0 %v1586
    %2201 = vmatpush1.bf16.msra.mxu0 %v1585
    %2202 = vmatprep.subr.bf16.mxu0 %v1616
    %2203 = vmatpush2.bf16.msra.mxu0 %v1615
    %2204 = vmatprep.subr.bf16.mxu0 %v1614
    %2205 = vmatpush2.bf16.msra.mxu0 %v1613
    %2206 = vmatprep.subr.bf16.mxu0 %v1612
    %2207 = vmatpush2.bf16.msra.mxu0 %v1611
    %2208 = vmatprep.subr.bf16.mxu0 %v1610
    %2209 = vmatpush2.bf16.msra.mxu0 %v1609
    %2210 = vmatprep.subr.bf16.mxu0 %v1608
    %2211 = vmatpush2.bf16.msra.mxu0 %v1607
    %2212 = vmatprep.subr.bf16.mxu0 %v1606
    %2213 = vmatpush2.bf16.msra.mxu0 %v1605
    %2214 = vmatprep.subr.bf16.mxu0 %v1604
    %2215 = vmatpush2.bf16.msra.mxu0 %v1603
    %2216 = vmatprep.subr.bf16.mxu0 %v1602
    %2217 = vmatpush2.bf16.msra.mxu0 %v1601
    %2218 = vmatprep.mubr.bf16.mxu0 %v349
    %2219 = vmatmul.mubr.bf16.gmra.mxu0 %v348
    %v2220 = vpop.f32.mrf.mxu0
    %v2221 = vadd.f32 %v2180, %v2220
    %v2222 = vpop.f32.mrf.mxu0
    %v2223 = vadd.f32 %v2182, %v2222
    %v2224 = vpop.f32.mrf.mxu0
    %v2225 = vpop.f32.mrf.mxu0
    %2226 = vdwg.mxu0
    %2227 = vmatprep.subr.bf16.mxu0 %v1632
    %2228 = vmatpush1.bf16.msra.mxu0 %v1631
    %2229 = vmatprep.subr.bf16.mxu0 %v1630
    %2230 = vmatpush1.bf16.msra.mxu0 %v1629
    %2231 = vmatprep.subr.bf16.mxu0 %v1628
    %2232 = vmatpush1.bf16.msra.mxu0 %v1627
    %2233 = vmatprep.subr.bf16.mxu0 %v1626
    %2234 = vmatpush1.bf16.msra.mxu0 %v1625
    %2235 = vmatprep.subr.bf16.mxu0 %v1624
    %2236 = vmatpush1.bf16.msra.mxu0 %v1623
    %2237 = vmatprep.subr.bf16.mxu0 %v1622
    %2238 = vmatpush1.bf16.msra.mxu0 %v1621
    %2239 = vmatprep.subr.bf16.mxu0 %v1620
    %2240 = vmatpush1.bf16.msra.mxu0 %v1619
    %2241 = vmatprep.subr.bf16.mxu0 %v1618
    %2242 = vmatpush1.bf16.msra.mxu0 %v1617
    %2243 = vmatprep.subr.bf16.mxu0 %v1648
    %2244 = vmatpush2.bf16.msra.mxu0 %v1647
    %2245 = vmatprep.subr.bf16.mxu0 %v1646
    %2246 = vmatpush2.bf16.msra.mxu0 %v1645
    %2247 = vmatprep.subr.bf16.mxu0 %v1644
    %2248 = vmatpush2.bf16.msra.mxu0 %v1643
    %2249 = vmatprep.subr.bf16.mxu0 %v1642
    %2250 = vmatpush2.bf16.msra.mxu0 %v1641
    %2251 = vmatprep.subr.bf16.mxu0 %v1640
    %2252 = vmatpush2.bf16.msra.mxu0 %v1639
    %2253 = vmatprep.subr.bf16.mxu0 %v1638
    %2254 = vmatpush2.bf16.msra.mxu0 %v1637
    %2255 = vmatprep.subr.bf16.mxu0 %v1636
    %2256 = vmatpush2.bf16.msra.mxu0 %v1635
    %2257 = vmatprep.subr.bf16.mxu0 %v1634
    %2258 = vmatpush2.bf16.msra.mxu0 %v1633
    %2259 = vmatprep.mubr.bf16.mxu0 %v351
    %2260 = vmatmul.mubr.bf16.gmra.mxu0 %v350
    %v2261 = vpop.f32.mrf.mxu0
    %v2262 = vadd.f32 %v2221, %v2261
    %v2263 = vpop.f32.mrf.mxu0
    %v2264 = vadd.f32 %v2223, %v2263
    %v2265 = vpop.f32.mrf.mxu0
    %v2266 = vpop.f32.mrf.mxu0
    %2267 = vdwg.mxu0
    %2268 = vmatprep.subr.bf16.mxu0 %v1664
    %2269 = vmatpush1.bf16.msra.mxu0 %v1663
    %2270 = vmatprep.subr.bf16.mxu0 %v1662
    %2271 = vmatpush1.bf16.msra.mxu0 %v1661
    %2272 = vmatprep.subr.bf16.mxu0 %v1660
    %2273 = vmatpush1.bf16.msra.mxu0 %v1659
    %2274 = vmatprep.subr.bf16.mxu0 %v1658
    %2275 = vmatpush1.bf16.msra.mxu0 %v1657
    %2276 = vmatprep.subr.bf16.mxu0 %v1656
    %2277 = vmatpush1.bf16.msra.mxu0 %v1655
    %2278 = vmatprep.subr.bf16.mxu0 %v1654
    %2279 = vmatpush1.bf16.msra.mxu0 %v1653
    %2280 = vmatprep.subr.bf16.mxu0 %v1652
    %2281 = vmatpush1.bf16.msra.mxu0 %v1651
    %2282 = vmatprep.subr.bf16.mxu0 %v1650
    %2283 = vmatpush1.bf16.msra.mxu0 %v1649
    %2284 = vmatprep.subr.bf16.mxu0 %v1680
    %2285 = vmatpush2.bf16.msra.mxu0 %v1679
    %2286 = vmatprep.subr.bf16.mxu0 %v1678
    %2287 = vmatpush2.bf16.msra.mxu0 %v1677
    %2288 = vmatprep.subr.bf16.mxu0 %v1676
    %2289 = vmatpush2.bf16.msra.mxu0 %v1675
    %2290 = vmatprep.subr.bf16.mxu0 %v1674
    %2291 = vmatpush2.bf16.msra.mxu0 %v1673
    %2292 = vmatprep.subr.bf16.mxu0 %v1672
    %2293 = vmatpush2.bf16.msra.mxu0 %v1671
    %2294 = vmatprep.subr.bf16.mxu0 %v1670
    %2295 = vmatpush2.bf16.msra.mxu0 %v1669
    %2296 = vmatprep.subr.bf16.mxu0 %v1668
    %2297 = vmatpush2.bf16.msra.mxu0 %v1667
    %2298 = vmatprep.subr.bf16.mxu0 %v1666
    %2299 = vmatpush2.bf16.msra.mxu0 %v1665
    %2300 = vmatprep.mubr.bf16.mxu0 %v353
    %2301 = vmatmul.mubr.bf16.gmra.mxu0 %v352
    %v2302 = vpop.f32.mrf.mxu0
    %v2303 = vadd.f32 %v2262, %v2302
    %v2304 = vpop.f32.mrf.mxu0
    %v2305 = vadd.f32 %v2264, %v2304
    %v2306 = vpop.f32.mrf.mxu0
    %v2307 = vpop.f32.mrf.mxu0
    %2308 = vdwg.mxu0
    %2309 = vmatprep.subr.bf16.mxu0 %v1696
    %2310 = vmatpush1.bf16.msra.mxu0 %v1695
    %2311 = vmatprep.subr.bf16.mxu0 %v1694
    %2312 = vmatpush1.bf16.msra.mxu0 %v1693
    %2313 = vmatprep.subr.bf16.mxu0 %v1692
    %2314 = vmatpush1.bf16.msra.mxu0 %v1691
    %2315 = vmatprep.subr.bf16.mxu0 %v1690
    %2316 = vmatpush1.bf16.msra.mxu0 %v1689
    %2317 = vmatprep.subr.bf16.mxu0 %v1688
    %2318 = vmatpush1.bf16.msra.mxu0 %v1687
    %2319 = vmatprep.subr.bf16.mxu0 %v1686
    %2320 = vmatpush1.bf16.msra.mxu0 %v1685
    %2321 = vmatprep.subr.bf16.mxu0 %v1684
    %2322 = vmatpush1.bf16.msra.mxu0 %v1683
    %2323 = vmatprep.subr.bf16.mxu0 %v1682
    %2324 = vmatpush1.bf16.msra.mxu0 %v1681
    %2325 = vmatprep.subr.bf16.mxu0 %v1712
    %2326 = vmatpush2.bf16.msra.mxu0 %v1711
    %2327 = vmatprep.subr.bf16.mxu0 %v1710
    %2328 = vmatpush2.bf16.msra.mxu0 %v1709
    %2329 = vmatprep.subr.bf16.mxu0 %v1708
    %2330 = vmatpush2.bf16.msra.mxu0 %v1707
    %2331 = vmatprep.subr.bf16.mxu0 %v1706
    %2332 = vmatpush2.bf16.msra.mxu0 %v1705
    %2333 = vmatprep.subr.bf16.mxu0 %v1704
    %2334 = vmatpush2.bf16.msra.mxu0 %v1703
    %2335 = vmatprep.subr.bf16.mxu0 %v1702
    %2336 = vmatpush2.bf16.msra.mxu0 %v1701
    %2337 = vmatprep.subr.bf16.mxu0 %v1700
    %2338 = vmatpush2.bf16.msra.mxu0 %v1699
    %2339 = vmatprep.subr.bf16.mxu0 %v1698
    %2340 = vmatpush2.bf16.msra.mxu0 %v1697
    %2341 = vmatprep.mubr.bf16.mxu0 %v355
    %2342 = vmatmul.mubr.bf16.gmra.mxu0 %v354
    %v2343 = vpop.f32.mrf.mxu0
    %v2344 = vadd.f32 %v2303, %v2343
    %v2345 = vpop.f32.mrf.mxu0
    %v2346 = vadd.f32 %v2305, %v2345
    %v2347 = vpop.f32.mrf.mxu0
    %v2348 = vpop.f32.mrf.mxu0
    %2349 = vdwg.mxu0
    %2350 = vmatprep.subr.bf16.mxu0 %v1728
    %2351 = vmatpush1.bf16.msra.mxu0 %v1727
    %2352 = vmatprep.subr.bf16.mxu0 %v1726
    %2353 = vmatpush1.bf16.msra.mxu0 %v1725
    %2354 = vmatprep.subr.bf16.mxu0 %v1724
    %2355 = vmatpush1.bf16.msra.mxu0 %v1723
    %2356 = vmatprep.subr.bf16.mxu0 %v1722
    %2357 = vmatpush1.bf16.msra.mxu0 %v1721
    %2358 = vmatprep.subr.bf16.mxu0 %v1720
    %2359 = vmatpush1.bf16.msra.mxu0 %v1719
    %2360 = vmatprep.subr.bf16.mxu0 %v1718
    %2361 = vmatpush1.bf16.msra.mxu0 %v1717
    %2362 = vmatprep.subr.bf16.mxu0 %v1716
    %2363 = vmatpush1.bf16.msra.mxu0 %v1715
    %2364 = vmatprep.subr.bf16.mxu0 %v1714
    %2365 = vmatpush1.bf16.msra.mxu0 %v1713
    %2366 = vmatprep.subr.bf16.mxu0 %v1744
    %2367 = vmatpush2.bf16.msra.mxu0 %v1743
    %2368 = vmatprep.subr.bf16.mxu0 %v1742
    %2369 = vmatpush2.bf16.msra.mxu0 %v1741
    %2370 = vmatprep.subr.bf16.mxu0 %v1740
    %2371 = vmatpush2.bf16.msra.mxu0 %v1739
    %2372 = vmatprep.subr.bf16.mxu0 %v1738
    %2373 = vmatpush2.bf16.msra.mxu0 %v1737
    %2374 = vmatprep.subr.bf16.mxu0 %v1736
    %2375 = vmatpush2.bf16.msra.mxu0 %v1735
    %2376 = vmatprep.subr.bf16.mxu0 %v1734
    %2377 = vmatpush2.bf16.msra.mxu0 %v1733
    %2378 = vmatprep.subr.bf16.mxu0 %v1732
    %2379 = vmatpush2.bf16.msra.mxu0 %v1731
    %2380 = vmatprep.subr.bf16.mxu0 %v1730
    %2381 = vmatpush2.bf16.msra.mxu0 %v1729
    %2382 = vmatprep.mubr.bf16.mxu0 %v357
    %2383 = vmatmul.mubr.bf16.gmra.mxu0 %v356
    %v2384 = vpop.f32.mrf.mxu0
    %v2385 = vadd.f32 %v2344, %v2384
    %v2386 = vpop.f32.mrf.mxu0
    %v2387 = vadd.f32 %v2346, %v2386
    %v2388 = vpop.f32.mrf.mxu0
    %v2389 = vpop.f32.mrf.mxu0
    %2390 = vdwg.mxu0
    %2391 = vmatprep.subr.bf16.mxu0 %v1760
    %2392 = vmatpush1.bf16.msra.mxu0 %v1759
    %2393 = vmatprep.subr.bf16.mxu0 %v1758
    %2394 = vmatpush1.bf16.msra.mxu0 %v1757
    %2395 = vmatprep.subr.bf16.mxu0 %v1756
    %2396 = vmatpush1.bf16.msra.mxu0 %v1755
    %2397 = vmatprep.subr.bf16.mxu0 %v1754
    %2398 = vmatpush1.bf16.msra.mxu0 %v1753
    %2399 = vmatprep.subr.bf16.mxu0 %v1752
    %2400 = vmatpush1.bf16.msra.mxu0 %v1751
    %2401 = vmatprep.subr.bf16.mxu0 %v1750
    %2402 = vmatpush1.bf16.msra.mxu0 %v1749
    %2403 = vmatprep.subr.bf16.mxu0 %v1748
    %2404 = vmatpush1.bf16.msra.mxu0 %v1747
    %2405 = vmatprep.subr.bf16.mxu0 %v1746
    %2406 = vmatpush1.bf16.msra.mxu0 %v1745
    %2407 = vmatprep.subr.bf16.mxu0 %v1776
    %2408 = vmatpush2.bf16.msra.mxu0 %v1775
    %2409 = vmatprep.subr.bf16.mxu0 %v1774
    %2410 = vmatpush2.bf16.msra.mxu0 %v1773
    %2411 = vmatprep.subr.bf16.mxu0 %v1772
    %2412 = vmatpush2.bf16.msra.mxu0 %v1771
    %2413 = vmatprep.subr.bf16.mxu0 %v1770
    %2414 = vmatpush2.bf16.msra.mxu0 %v1769
    %2415 = vmatprep.subr.bf16.mxu0 %v1768
    %2416 = vmatpush2.bf16.msra.mxu0 %v1767
    %2417 = vmatprep.subr.bf16.mxu0 %v1766
    %2418 = vmatpush2.bf16.msra.mxu0 %v1765
    %2419 = vmatprep.subr.bf16.mxu0 %v1764
    %2420 = vmatpush2.bf16.msra.mxu0 %v1763
    %2421 = vmatprep.subr.bf16.mxu0 %v1762
    %2422 = vmatpush2.bf16.msra.mxu0 %v1761
    %2423 = vmatprep.mubr.bf16.mxu0 %v359
    %2424 = vmatmul.mubr.bf16.gmra.mxu0 %v358
    %v2425 = vpop.f32.mrf.mxu0
    %v2426 = vadd.f32 %v2385, %v2425
    %v2427 = vpop.f32.mrf.mxu0
    %v2428 = vadd.f32 %v2387, %v2427
    %v2429 = vpop.f32.mrf.mxu0
    %v2430 = vpop.f32.mrf.mxu0
    %2431 = vdwg.mxu0
    %2432 = vmatprep.subr.bf16.mxu0 %v1792
    %2433 = vmatpush1.bf16.msra.mxu0 %v1791
    %2434 = vmatprep.subr.bf16.mxu0 %v1790
    %2435 = vmatpush1.bf16.msra.mxu0 %v1789
    %2436 = vmatprep.subr.bf16.mxu0 %v1788
    %2437 = vmatpush1.bf16.msra.mxu0 %v1787
    %2438 = vmatprep.subr.bf16.mxu0 %v1786
    %2439 = vmatpush1.bf16.msra.mxu0 %v1785
    %2440 = vmatprep.subr.bf16.mxu0 %v1784
    %2441 = vmatpush1.bf16.msra.mxu0 %v1783
    %2442 = vmatprep.subr.bf16.mxu0 %v1782
    %2443 = vmatpush1.bf16.msra.mxu0 %v1781
    %2444 = vmatprep.subr.bf16.mxu0 %v1780
    %2445 = vmatpush1.bf16.msra.mxu0 %v1779
    %2446 = vmatprep.subr.bf16.mxu0 %v1778
    %2447 = vmatpush1.bf16.msra.mxu0 %v1777
    %2448 = vmatprep.subr.bf16.mxu0 %v1808
    %2449 = vmatpush2.bf16.msra.mxu0 %v1807
    %2450 = vmatprep.subr.bf16.mxu0 %v1806
    %2451 = vmatpush2.bf16.msra.mxu0 %v1805
    %2452 = vmatprep.subr.bf16.mxu0 %v1804
    %2453 = vmatpush2.bf16.msra.mxu0 %v1803
    %2454 = vmatprep.subr.bf16.mxu0 %v1802
    %2455 = vmatpush2.bf16.msra.mxu0 %v1801
    %2456 = vmatprep.subr.bf16.mxu0 %v1800
    %2457 = vmatpush2.bf16.msra.mxu0 %v1799
    %2458 = vmatprep.subr.bf16.mxu0 %v1798
    %2459 = vmatpush2.bf16.msra.mxu0 %v1797
    %2460 = vmatprep.subr.bf16.mxu0 %v1796
    %2461 = vmatpush2.bf16.msra.mxu0 %v1795
    %2462 = vmatprep.subr.bf16.mxu0 %v1794
    %2463 = vmatpush2.bf16.msra.mxu0 %v1793
    %2464 = vmatprep.mubr.bf16.mxu0 %v361
    %2465 = vmatmul.mubr.bf16.gmra.mxu0 %v360
    %v2466 = vpop.f32.mrf.mxu0
    %v2467 = vadd.f32 %v2426, %v2466
    %v2468 = vpop.f32.mrf.mxu0
    %v2469 = vadd.f32 %v2428, %v2468
    %v2470 = vpop.f32.mrf.mxu0
    %v2471 = vpop.f32.mrf.mxu0
    %2472 = vdwg.mxu0
    %2473 = vmatprep.subr.bf16.mxu0 %v1824
    %2474 = vmatpush1.bf16.msra.mxu0 %v1823
    %2475 = vmatprep.subr.bf16.mxu0 %v1822
    %2476 = vmatpush1.bf16.msra.mxu0 %v1821
    %2477 = vmatprep.subr.bf16.mxu0 %v1820
    %2478 = vmatpush1.bf16.msra.mxu0 %v1819
    %2479 = vmatprep.subr.bf16.mxu0 %v1818
    %2480 = vmatpush1.bf16.msra.mxu0 %v1817
    %2481 = vmatprep.subr.bf16.mxu0 %v1816
    %2482 = vmatpush1.bf16.msra.mxu0 %v1815
    %2483 = vmatprep.subr.bf16.mxu0 %v1814
    %2484 = vmatpush1.bf16.msra.mxu0 %v1813
    %2485 = vmatprep.subr.bf16.mxu0 %v1812
    %2486 = vmatpush1.bf16.msra.mxu0 %v1811
    %2487 = vmatprep.subr.bf16.mxu0 %v1810
    %2488 = vmatpush1.bf16.msra.mxu0 %v1809
    %2489 = vmatprep.subr.bf16.mxu0 %v1840
    %2490 = vmatpush2.bf16.msra.mxu0 %v1839
    %2491 = vmatprep.subr.bf16.mxu0 %v1838
    %2492 = vmatpush2.bf16.msra.mxu0 %v1837
    %2493 = vmatprep.subr.bf16.mxu0 %v1836
    %2494 = vmatpush2.bf16.msra.mxu0 %v1835
    %2495 = vmatprep.subr.bf16.mxu0 %v1834
    %2496 = vmatpush2.bf16.msra.mxu0 %v1833
    %2497 = vmatprep.subr.bf16.mxu0 %v1832
    %2498 = vmatpush2.bf16.msra.mxu0 %v1831
    %2499 = vmatprep.subr.bf16.mxu0 %v1830
    %2500 = vmatpush2.bf16.msra.mxu0 %v1829
    %2501 = vmatprep.subr.bf16.mxu0 %v1828
    %2502 = vmatpush2.bf16.msra.mxu0 %v1827
    %2503 = vmatprep.subr.bf16.mxu0 %v1826
    %2504 = vmatpush2.bf16.msra.mxu0 %v1825
    %2505 = vmatprep.mubr.bf16.mxu0 %v363
    %2506 = vmatmul.mubr.bf16.gmra.mxu0 %v362
    %v2507 = vpop.f32.mrf.mxu0
    %v2508 = vadd.f32 %v2467, %v2507
    %v2509 = vpop.f32.mrf.mxu0
    %v2510 = vadd.f32 %v2469, %v2509
    %v2511 = vpop.f32.mrf.mxu0
    %v2512 = vpop.f32.mrf.mxu0
    %2513 = vdwg.mxu0
    %2514 = vmatprep.subr.bf16.mxu0 0
    %2515 = vmatpush1.bf16.msra.mxu0 0
    %2516 = vmatprep.subr.bf16.mxu0 0
    %2517 = vmatpush1.bf16.msra.mxu0 0
    %2518 = vmatprep.subr.bf16.mxu0 0
    %2519 = vmatpush1.bf16.msra.mxu0 0
    %2520 = vmatprep.subr.bf16.mxu0 0
    %2521 = vmatpush1.bf16.msra.mxu0 0
    %2522 = vmatprep.subr.bf16.mxu0 0
    %2523 = vmatpush1.bf16.msra.mxu0 0
    %2524 = vmatprep.subr.bf16.mxu0 %v1846
    %2525 = vmatpush1.bf16.msra.mxu0 %v1845
    %2526 = vmatprep.subr.bf16.mxu0 %v1844
    %2527 = vmatpush1.bf16.msra.mxu0 %v1843
    %2528 = vmatprep.subr.bf16.mxu0 %v1842
    %2529 = vmatpush1.bf16.msra.mxu0 %v1841
    %2530 = vmatprep.subr.bf16.mxu0 0
    %2531 = vmatpush2.bf16.msra.mxu0 0
    %2532 = vmatprep.subr.bf16.mxu0 0
    %2533 = vmatpush2.bf16.msra.mxu0 0
    %2534 = vmatprep.subr.bf16.mxu0 0
    %2535 = vmatpush2.bf16.msra.mxu0 0
    %2536 = vmatprep.subr.bf16.mxu0 0
    %2537 = vmatpush2.bf16.msra.mxu0 0
    %2538 = vmatprep.subr.bf16.mxu0 0
    %2539 = vmatpush2.bf16.msra.mxu0 0
    %2540 = vmatprep.subr.bf16.mxu0 0
    %2541 = vmatpush2.bf16.msra.mxu0 0
    %2542 = vmatprep.subr.bf16.mxu0 0
    %2543 = vmatpush2.bf16.msra.mxu0 0
    %2544 = vmatprep.subr.bf16.mxu0 0
    %2545 = vmatpush2.bf16.msra.mxu0 0
    %2546 = vmatprep.mubr.bf16.mxu0 0
    %2547 = vmatmul.mubr.bf16.gmra.mxu0 %v2143
    %v2548 = vpop.f32.mrf.mxu0
    %v2549 = vadd.f32 %v2508, %v2548
    %v2550 = vpop.f32.mrf.mxu0
    %v2551 = vadd.f32 %v2510, %v2550
    %v2552 = vpop.f32.mrf.mxu0
    %v2553 = vpop.f32.mrf.mxu0
    %2554 = vdwg.mxu0
    %v2555 = vmax.f32 %v2549, 0.0
    %v2556 = vmax.f32 %v2551, 0.0
    %v2557 = vpack.c.bf16 %v2555, %v2555
    %v2558 = vpack.c.bf16 %v2556, %v2556
    %v2559 = vld [vmem:[#allocation7] sm:$0xf]
    %v2560 = vld [vmem:[#allocation7 + $0x4] sm:$0xf]
    %v2561 = vld [vmem:[#allocation7 + $0x8] sm:$0xf]
    %v2562 = vld [vmem:[#allocation7 + $0xc] sm:$0xf]
    %v2563 = vld [vmem:[#allocation7 + $0x10] sm:$0xf]
    %v2564 = vld [vmem:[#allocation7 + $0x14] sm:$0xf]
    %v2565 = vld [vmem:[#allocation7 + $0x18] sm:$0xf]
    %v2566 = vld [vmem:[#allocation7 + $0x1c] sm:$0xf]
    %v2567 = vld [vmem:[#allocation7 + $0x20] sm:$0xf]
    %v2568 = vld [vmem:[#allocation7 + $0x24] sm:$0xf]
    %v2569 = vld [vmem:[#allocation7 + $0x28] sm:$0xf]
    %v2570 = vld [vmem:[#allocation7 + $0x2c] sm:$0xf]
    %v2571 = vld [vmem:[#allocation7 + $0x30] sm:$0xf]
    %v2572 = vld [vmem:[#allocation7 + $0x34] sm:$0xf]
    %v2573 = vld [vmem:[#allocation7 + $0x38] sm:$0xf]
    %v2574 = vld [vmem:[#allocation7 + $0x3c] sm:$0xf]
    %v2575 = vld [vmem:[#allocation7 + $0x40] sm:$0xf]
    %v2576 = vld [vmem:[#allocation7 + $0x44] sm:$0xf]
    %v2577 = vld [vmem:[#allocation7 + $0x48] sm:$0xf]
    %v2578 = vld [vmem:[#allocation7 + $0x4c] sm:$0xf]
    %v2579 = vld [vmem:[#allocation7 + $0x50] sm:$0xf]
    %v2580 = vld [vmem:[#allocation7 + $0x54] sm:$0xf]
    %v2581 = vld [vmem:[#allocation7 + $0x58] sm:$0xf]
    %v2582 = vld [vmem:[#allocation7 + $0x5c] sm:$0xf]
    %v2583 = vld [vmem:[#allocation7 + $0x60] sm:$0xf]
    %v2584 = vld [vmem:[#allocation7 + $0x64] sm:$0xf]
    %v2585 = vld [vmem:[#allocation7 + $0x68] sm:$0xf]
    %v2586 = vld [vmem:[#allocation7 + $0x6c] sm:$0xf]
    %v2587 = vld [vmem:[#allocation7 + $0x70] sm:$0xf]
    %v2588 = vld [vmem:[#allocation7 + $0x74] sm:$0xf]
    %v2589 = vld [vmem:[#allocation7 + $0x78] sm:$0xf]
    %v2590 = vld [vmem:[#allocation7 + $0x7c] sm:$0xf]
    %v2591 = vld [vmem:[#allocation8] sm:$0x1]
    %v2593 = vlaneseq
    %v2594 = vshrl.u32 %v2593, 7
    %v2595 = vsub.s32 0, %v2594
    %v2596 = vrot.slane %v2591, %v2595
    %v2630 = vunpack.c.l.b16 %v2559
    %v2631 = vunpack.c.l.b16 %v2560
    %v2632 = vunpack.c.l.b16 %v2561
    %v2633 = vunpack.c.l.b16 %v2562
    %v2634 = vunpack.c.l.b16 %v2563
    %v2635 = vunpack.c.l.b16 %v2564
    %v2636 = vunpack.c.l.b16 %v2565
    %v2637 = vunpack.c.l.b16 %v2566
    %v2638 = vunpack.c.l.b16 %v2567
    %v2639 = vunpack.c.l.b16 %v2568
    %v2640 = vunpack.c.l.b16 %v2569
    %v2641 = vunpack.c.l.b16 %v2570
    %v2642 = vunpack.c.l.b16 %v2571
    %v2643 = vunpack.c.l.b16 %v2572
    %v2644 = vunpack.c.l.b16 %v2573
    %v2645 = vunpack.c.l.b16 %v2574
    %v2646 = vunpack.c.l.b16 %v2575
    %v2647 = vunpack.c.l.b16 %v2576
    %v2648 = vunpack.c.l.b16 %v2577
    %v2649 = vunpack.c.l.b16 %v2578
    %v2650 = vunpack.c.l.b16 %v2579
    %v2651 = vunpack.c.l.b16 %v2580
    %v2652 = vunpack.c.l.b16 %v2581
    %v2653 = vunpack.c.l.b16 %v2582
    %v2654 = vunpack.c.l.b16 %v2583
    %v2655 = vunpack.c.l.b16 %v2584
    %v2656 = vunpack.c.l.b16 %v2585
    %v2657 = vunpack.c.l.b16 %v2586
    %v2658 = vunpack.c.l.b16 %v2587
    %v2659 = vunpack.c.l.b16 %v2588
    %v2660 = vunpack.c.l.b16 %v2589
    %v2661 = vunpack.c.l.b16 %v2590
    %v2662 = vpack.c.b16 %v2631, %v2630
    %v2663 = vpack.c.b16 %v2633, %v2632
    %v2664 = vpack.c.b16 %v2635, %v2634
    %v2665 = vpack.c.b16 %v2637, %v2636
    %v2666 = vpack.c.b16 %v2639, %v2638
    %v2667 = vpack.c.b16 %v2641, %v2640
    %v2668 = vpack.c.b16 %v2643, %v2642
    %v2669 = vpack.c.b16 %v2645, %v2644
    %v2670 = vpack.c.b16 %v2647, %v2646
    %v2671 = vpack.c.b16 %v2649, %v2648
    %v2672 = vpack.c.b16 %v2651, %v2650
    %v2673 = vpack.c.b16 %v2653, %v2652
    %v2674 = vpack.c.b16 %v2655, %v2654
    %v2675 = vpack.c.b16 %v2657, %v2656
    %v2676 = vpack.c.b16 %v2659, %v2658
    %v2677 = vpack.c.b16 %v2661, %v2660
    %2694 = vmatprep.subr.bf16.mxu0 0
    %2695 = vmatpush1.bf16.msra.mxu0 %v2669
    %2696 = vmatprep.subr.bf16.mxu0 0
    %2697 = vmatpush1.bf16.msra.mxu0 %v2668
    %2698 = vmatprep.subr.bf16.mxu0 0
    %2699 = vmatpush1.bf16.msra.mxu0 %v2667
    %2700 = vmatprep.subr.bf16.mxu0 0
    %2701 = vmatpush1.bf16.msra.mxu0 %v2666
    %2702 = vmatprep.subr.bf16.mxu0 0
    %2703 = vmatpush1.bf16.msra.mxu0 %v2665
    %2704 = vmatprep.subr.bf16.mxu0 0
    %2705 = vmatpush1.bf16.msra.mxu0 %v2664
    %2706 = vmatprep.subr.bf16.mxu0 0
    %2707 = vmatpush1.bf16.msra.mxu0 %v2663
    %2708 = vmatprep.subr.bf16.mxu0 0
    %2709 = vmatpush1.bf16.msra.mxu0 %v2662
    %2710 = vmatprep.subr.bf16.mxu0 0
    %2711 = vmatpush2.bf16.msra.mxu0 %v2677
    %2712 = vmatprep.subr.bf16.mxu0 0
    %2713 = vmatpush2.bf16.msra.mxu0 %v2676
    %2714 = vmatprep.subr.bf16.mxu0 0
    %2715 = vmatpush2.bf16.msra.mxu0 %v2675
    %2716 = vmatprep.subr.bf16.mxu0 0
    %2717 = vmatpush2.bf16.msra.mxu0 %v2674
    %2718 = vmatprep.subr.bf16.mxu0 0
    %2719 = vmatpush2.bf16.msra.mxu0 %v2673
    %2720 = vmatprep.subr.bf16.mxu0 0
    %2721 = vmatpush2.bf16.msra.mxu0 %v2672
    %2722 = vmatprep.subr.bf16.mxu0 0
    %2723 = vmatpush2.bf16.msra.mxu0 %v2671
    %2724 = vmatprep.subr.bf16.mxu0 0
    %2725 = vmatpush2.bf16.msra.mxu0 %v2670
    %2726 = vmatprep.mubr.bf16.mxu0 %v2558
    %2727 = vmatmul.mubr.bf16.gmra.mxu0 %v2557
    %v2728 = vpop.f32.mrf.mxu0
    %v2729 = vadd.f32 %v2596, %v2728
    %v2730 = vpop.f32.mrf.mxu0
    %v2731 = vpop.f32.mrf.mxu0
    %v2732 = vpop.f32.mrf.mxu0
    %2733 = vdwg.mxu0
    %v2734 = vmax.f32 %v2729, 0.0
    %v2735 = vpack.c.bf16 %v2734, %v2734
    %v2736 = vld [vmem:[#allocation10] sm:$0xf]
    %v2737 = vld [vmem:[#allocation10 + $0x4] sm:$0xf]
    %v2738 = vld [vmem:[#allocation10 + $0x8] sm:$0xf]
    %v2739 = vld [vmem:[#allocation10 + $0xc] sm:$0xf]
    %v2740 = vld [vmem:[#allocation10 + $0x10] sm:$0xf]
    %v2741 = vld [vmem:[#allocation10 + $0x14] sm:$0xf]
    %v2742 = vld [vmem:[#allocation10 + $0x18] sm:$0xf]
    %v2743 = vld [vmem:[#allocation10 + $0x1c] sm:$0xf]
    %v2744 = vld [vmem:[#allocation10 + $0x20] sm:$0xf]
    %v2745 = vld [vmem:[#allocation10 + $0x24] sm:$0xf]
    %v2746 = vld [vmem:[#allocation10 + $0x28] sm:$0xf]
    %v2747 = vld [vmem:[#allocation10 + $0x2c] sm:$0xf]
    %v2748 = vld [vmem:[#allocation10 + $0x30] sm:$0xf]
    %v2749 = vld [vmem:[#allocation10 + $0x34] sm:$0xf]
    %v2750 = vld [vmem:[#allocation10 + $0x38] sm:$0xf]
    %v2751 = vld [vmem:[#allocation10 + $0x3c] sm:$0xf]
    %v2752 = vld [vmem:[#allocation11] sm:$0x1]
    %v2754 = vlaneseq
    %v2755 = vshrl.u32 %v2754, 7
    %v2756 = vsub.s32 0, %v2755
    %v2757 = vrot.slane %v2752, %v2756
    %v2775 = vunpack.c.l.b16 %v2736
    %v2776 = vunpack.c.l.b16 %v2737
    %v2777 = vunpack.c.l.b16 %v2738
    %v2778 = vunpack.c.l.b16 %v2739
    %v2779 = vunpack.c.l.b16 %v2740
    %v2780 = vunpack.c.l.b16 %v2741
    %v2781 = vunpack.c.l.b16 %v2742
    %v2782 = vunpack.c.l.b16 %v2743
    %v2783 = vunpack.c.l.b16 %v2744
    %v2784 = vunpack.c.l.b16 %v2745
    %v2785 = vunpack.c.l.b16 %v2746
    %v2786 = vunpack.c.l.b16 %v2747
    %v2787 = vunpack.c.l.b16 %v2748
    %v2788 = vunpack.c.l.b16 %v2749
    %v2789 = vunpack.c.l.b16 %v2750
    %v2790 = vunpack.c.l.b16 %v2751
    %v2791 = vpack.c.b16 %v2776, %v2775
    %v2792 = vpack.c.b16 %v2778, %v2777
    %v2793 = vpack.c.b16 %v2780, %v2779
    %v2794 = vpack.c.b16 %v2782, %v2781
    %v2795 = vpack.c.b16 %v2784, %v2783
    %v2796 = vpack.c.b16 %v2786, %v2785
    %v2797 = vpack.c.b16 %v2788, %v2787
    %v2798 = vpack.c.b16 %v2790, %v2789
    %2807 = vmatprep.subr.bf16.mxu0 0
    %2808 = vmatpush1.bf16.msra.mxu0 %v2798
    %2809 = vmatprep.subr.bf16.mxu0 0
    %2810 = vmatpush1.bf16.msra.mxu0 %v2797
    %2811 = vmatprep.subr.bf16.mxu0 0
    %2812 = vmatpush1.bf16.msra.mxu0 %v2796
    %2813 = vmatprep.subr.bf16.mxu0 0
    %2814 = vmatpush1.bf16.msra.mxu0 %v2795
    %2815 = vmatprep.subr.bf16.mxu0 0
    %2816 = vmatpush1.bf16.msra.mxu0 %v2794
    %2817 = vmatprep.subr.bf16.mxu0 0
    %2818 = vmatpush1.bf16.msra.mxu0 %v2793
    %2819 = vmatprep.subr.bf16.mxu0 0
    %2820 = vmatpush1.bf16.msra.mxu0 %v2792
    %2821 = vmatprep.subr.bf16.mxu0 0
    %2822 = vmatpush1.bf16.msra.mxu0 %v2791
    %2823 = vmatprep.subr.bf16.mxu0 0
    %2824 = vmatpush2.bf16.msra.mxu0 0
    %2825 = vmatprep.subr.bf16.mxu0 0
    %2826 = vmatpush2.bf16.msra.mxu0 0
    %2827 = vmatprep.subr.bf16.mxu0 0
    %2828 = vmatpush2.bf16.msra.mxu0 0
    %2829 = vmatprep.subr.bf16.mxu0 0
    %2830 = vmatpush2.bf16.msra.mxu0 0
    %2831 = vmatprep.subr.bf16.mxu0 0
    %2832 = vmatpush2.bf16.msra.mxu0 0
    %2833 = vmatprep.subr.bf16.mxu0 0
    %2834 = vmatpush2.bf16.msra.mxu0 0
    %2835 = vmatprep.subr.bf16.mxu0 0
    %2836 = vmatpush2.bf16.msra.mxu0 0
    %2837 = vmatprep.subr.bf16.mxu0 0
    %2838 = vmatpush2.bf16.msra.mxu0 0
    %2839 = vmatprep.mubr.bf16.mxu0 0
    %2840 = vmatmul.mubr.bf16.gmra.mxu0 %v2735
    %v2841 = vpop.f32.mrf.mxu0
    %v2842 = vadd.f32 %v2757, %v2841
    %v2843 = vpop.f32.mrf.mxu0
    %v2844 = vpop.f32.mrf.mxu0
    %v2845 = vpop.f32.mrf.mxu0
    %2846 = vdwg.mxu0
    %v2849 = vcombine.low %v2557, %v2558
    %v2851 = vunpack.c.l.s4 1966171168
    %v2852 = vunpack.c.0.s8 %v2851
    %v2853 = vlaneseq
    %v2854 = vshrl.u32 %v2853, 7
    %v2855 = vsub.s32 %v2852, %v2854
    %v2856 = vrot.slane %v2849, %v2855
    %v2857 = vcombine.high %v2856, %v2856
    %v2859 = vunpack.c.l.s4 1966171168
    %v2860 = vunpack.c.0.s8 %v2859
    %v2861 = vlaneseq
    %v2862 = vshrl.u32 %v2861, 7
    %v2863 = vsub.s32 %v2860, %v2862
    %v2864 = vrot.slane %v2856, %v2863
    %v2866 = vunpack.c.l.s4 1966171168
    %v2867 = vunpack.c.0.s8 %v2866
    %v2868 = vlaneseq
    %v2869 = vshrl.u32 %v2868, 7
    %v2870 = vsub.s32 %v2867, %v2869
    %v2871 = vrot.slane %v2857, %v2870
    %v2872 = vcombine.high %v2864, %v2864
    %v2873 = vcombine.high %v2871, %v2871
    %2878 = vst [vmem:[#allocation13] sm:$0x3] %v2864
    %2879 = vst [vmem:[#allocation13 + $0x2] sm:$0x3] %v2871
    %2880 = vst [vmem:[#allocation13 + $0x4] sm:$0x3] %v2872
    %2881 = vst [vmem:[#allocation13 + $0x6] sm:$0x3] %v2873
    %v2884 = vunpack.c.l.s4 1966171168
    %v2885 = vunpack.c.0.s8 %v2884
    %v2886 = vlaneseq
    %v2887 = vshrl.u32 %v2886, 7
    %v2888 = vsub.s32 %v2885, %v2887
    %v2889 = vrot.slane %v2735, %v2888
    %v2890 = vcombine.high %v2889, %v2889
    %v2892 = vunpack.c.l.s4 1966171168
    %v2893 = vunpack.c.0.s8 %v2892
    %v2894 = vlaneseq
    %v2895 = vshrl.u32 %v2894, 7
    %v2896 = vsub.s32 %v2893, %v2895
    %v2897 = vrot.slane %v2889, %v2896
    %v2899 = vunpack.c.l.s4 1966171168
    %v2900 = vunpack.c.0.s8 %v2899
    %v2901 = vlaneseq
    %v2902 = vshrl.u32 %v2901, 7
    %v2903 = vsub.s32 %v2900, %v2902
    %v2904 = vrot.slane %v2890, %v2903
    %v2905 = vcombine.high %v2897, %v2897
    %v2906 = vcombine.high %v2904, %v2904
    %2911 = vst [vmem:[#allocation14] sm:$0x1] %v2897
    %2912 = vst [vmem:[#allocation14 + $0x1] sm:$0x1] %v2904
    %2913 = vst [vmem:[#allocation14 + $0x2] sm:$0x1] %v2905
    %2914 = vst [vmem:[#allocation14 + $0x3] sm:$0x1] %v2906
    %2915 = vst [vmem:[#allocation16] sm:$0xff] %v2842
    // Predicated region
    $region54: #{colored_mnist_forward.1} parent=1 // pred_check
      _
    $region55: #{colored_mnist_forward.1} parent=1 // pred_check_branch
      %2917 = sbr.rel (0) target = $region57
    $region56: #{colored_mnist_forward.1} parent=1 // pred_region
      %s2919 = ssub.s32 128, 32
      %2920 = vsyncadd [#allocation4], %s2919
      %s2921 = sshll.u32 [#allocation13], 4
      %s2922 = int_to_ptr.vmem [resolvable:$true] %s2921
      %2927 = dma.vmem_to_hbm [thread:$0]  %s2922, 32, %s7, [#allocation4], 32, 32, 2
    $region57: #{colored_mnist_forward.1} parent=1 // pred_fallthru
      _
    // Predicated region
    $region58: #{colored_mnist_forward.1} parent=1 // pred_check
      _
    $region59: #{colored_mnist_forward.1} parent=1 // pred_check_branch
      %2929 = sbr.rel (0) target = $region61
    $region60: #{colored_mnist_forward.1} parent=1 // pred_region
      %s2931 = ssub.s32 64, 16
      %2932 = vsyncadd [#allocation15], %s2931
      %s2933 = sshll.u32 [#allocation14], 4
      %s2934 = int_to_ptr.vmem [resolvable:$true] %s2933
      %2939 = dma.vmem_to_hbm [thread:$0]  %s2934, 16, %s8, [#allocation15], 16, 16, 1
    $region61: #{colored_mnist_forward.1} parent=1 // pred_fallthru
      _
    // Predicated region
    $region62: #{colored_mnist_forward.1} parent=1 // pred_check
      _
    $region63: #{colored_mnist_forward.1} parent=1 // pred_check_branch
      %2941 = sbr.rel (0) target = $region65
    $region64: #{colored_mnist_forward.1} parent=1 // pred_region
      %s2943 = ssub.s32 128, 32
      %2944 = vsyncadd [#allocation15], %s2943
      %s2945 = sshll.u32 [#allocation16], 4
      %s2946 = int_to_ptr.vmem [resolvable:$true] %s2945
      %2951 = dma.vmem_to_hbm [thread:$0]  %s2946, 32, %s9, [#allocation15], 32, 32, 2
    $region65: #{colored_mnist_forward.1} parent=1 // pred_fallthru
      _
    // Predicated region
    $region66: #{colored_mnist_forward.1} parent=1 // pred_check
      _
    $region67: #{colored_mnist_forward.1} parent=1 // pred_check_branch
      %2953 = sbr.rel (0) target = $region69
    $region68: #{colored_mnist_forward.1} parent=1 // pred_region
      %2954 = dma.done [#allocation4], 128
    $region69: #{colored_mnist_forward.1} parent=1 // pred_fallthru
      _
    // Predicated region
    $region70: #{colored_mnist_forward.1} parent=1 // pred_check
      _
    $region71: #{colored_mnist_forward.1} parent=1 // pred_check_branch
      %2956 = sbr.rel (0) target = $region73
    $region72: #{colored_mnist_forward.1} parent=1 // pred_region
      %2957 = dma.done [#allocation15], 64
    $region73: #{colored_mnist_forward.1} parent=1 // pred_fallthru
      _
    // Predicated region
    $region74: #{colored_mnist_forward.1} parent=1 // pred_check
      _
    $region75: #{colored_mnist_forward.1} parent=1 // pred_check_branch
      %2959 = sbr.rel (0) target = $region77
    $region76: #{colored_mnist_forward.1} parent=1 // pred_region
      %2960 = dma.done [#allocation15], 128
    $region77: #{colored_mnist_forward.1} parent=1 // pred_fallthru
      _
    %2961 = vsyncpa [#allocation3], 1
    %2962 = vsyncpa [#allocation6], 1
    %2963 = vsyncpa [#allocation9], 1
    %2964 = vsyncpa [#allocation12], 1
    %2965 = vsyncpa [#allocation4], 1
    %2966 = vsyncpa [#allocation15], 1

</llo_original>
